<compile_context>
chip_gen: v5e
topology: v5e:2x2
jax: 0.10.0
libtpu: 0.0.40
codegen_flags: <defaults>
</compile_context>

<pallas_src>
import functools
import numpy as np
import jax
import jax.numpy as jnp
from jax import lax
from jax.experimental import pallas as pl
from jax.experimental.pallas import tpu as pltpu

KERNEL_NUM = 128
KERNEL_SIZES = (2, 3, 4, 5)


def _round_up(x, m):
    return ((x + m - 1) // m) * m


def _pad_rows(x, rows):
    pad = rows - x.shape[0]
    if pad:
        x = jnp.pad(x, ((0, pad),) + ((0, 0),) * (x.ndim - 1))
    return x


# ---------------------------------------------------------------------------
# Generic row-tiled (M,K) @ (K,N) + bias kernel.  bf16 inputs, f32 accumulate.
# Used for the LSTM input projection and fc1 (with lane-padded N).
# ---------------------------------------------------------------------------
def matmul_bias_kernel(x_ref, w_ref, b_ref, o_ref):
    o_ref[...] = (jnp.dot(x_ref[...], w_ref[...],
                          preferred_element_type=jnp.float32) + b_ref[...])


def linear(x, w, b, *, tile=512):
    M, K = x.shape
    N = w.shape[1]
    b = b.reshape(1, N).astype(jnp.float32)
    tm = min(tile, _round_up(M, 8))
    Mp = _round_up(M, tm)
    xp = _pad_rows(x, Mp).astype(jnp.bfloat16)
    out = pl.pallas_call(
        matmul_bias_kernel,
        out_shape=jax.ShapeDtypeStruct((Mp, N), jnp.float32),
        grid=(Mp // tm,),
        in_specs=[pl.BlockSpec((tm, K), lambda i: (i, 0)),
                  pl.BlockSpec((K, N), lambda i: (0, 0)),
                  pl.BlockSpec((1, N), lambda i: (0, 0))],
        out_specs=pl.BlockSpec((tm, N), lambda i: (i, 0)),
        compiler_params=pltpu.CompilerParams(dimension_semantics=("parallel",)),
    )(xp, w.astype(jnp.bfloat16), b)
    return out[:M]


# ---------------------------------------------------------------------------
# Char CNN as one lane-dense matmul:  x_flat (N, L*E) @ W_big (L*E, sum_pos*128)
# then bias + ReLU + per-bank max over positions.  Output (N, 4*128).
# ---------------------------------------------------------------------------
def build_charcnn_packed(conv_ws, conv_bs, L, E):
    w_cols, b_cols, n_pos_list = [], [], []
    for (w, b), ks in zip(zip(conv_ws, conv_bs), KERNEL_SIZES):
        n_pos = L - ks + 1
        n_pos_list.append(n_pos)
        w_flat = w.reshape(ks * E, KERNEL_NUM)
        for p in range(n_pos):
            col = jnp.zeros((L * E, KERNEL_NUM), jnp.float32)
            col = col.at[p * E:(p + ks) * E, :].set(w_flat)
            w_cols.append(col)
            b_cols.append(b.reshape(1, KERNEL_NUM))
    return (jnp.concatenate(w_cols, axis=1),       # (L*E, total_cols)
            jnp.concatenate(b_cols, axis=1),       # (1, total_cols)
            tuple(n_pos_list))


def char_cnn_kernel(x_ref, w_ref, b_ref, o_ref, *, n_pos_list):
    s = jnp.dot(x_ref[...], w_ref[...], preferred_element_type=jnp.float32)
    s = jnp.maximum(s + b_ref[...], 0.0)           # bias + ReLU, f32
    off = 0
    for idx, n_pos in enumerate(n_pos_list):       # global max-pool per bank
        pooled = s[:, off:off + KERNEL_NUM]
        for p in range(1, n_pos):                  # 128-lane-aligned slices (cheap)
            pooled = jnp.maximum(
                pooled, s[:, off + p * KERNEL_NUM: off + (p + 1) * KERNEL_NUM])
        o_ref[:, idx * KERNEL_NUM:(idx + 1) * KERNEL_NUM] = pooled
        off += n_pos * KERNEL_NUM


def char_cnn(x_flat, w_big, b_big, n_pos_list, *, tile=256):
    N, LE = x_flat.shape
    total_cols = w_big.shape[1]
    out_dim = KERNEL_NUM * len(n_pos_list)
    tm = min(tile, _round_up(N, 8))
    Np = _round_up(N, tm)
    xp = _pad_rows(x_flat, Np).astype(jnp.bfloat16)
    kern = functools.partial(char_cnn_kernel, n_pos_list=n_pos_list)
    out = pl.pallas_call(
        kern,
        out_shape=jax.ShapeDtypeStruct((Np, out_dim), jnp.float32),
        grid=(Np // tm,),
        in_specs=[pl.BlockSpec((tm, LE), lambda i: (i, 0)),
                  pl.BlockSpec((LE, total_cols), lambda i: (0, 0)),
                  pl.BlockSpec((1, total_cols), lambda i: (0, 0))],
        out_specs=pl.BlockSpec((tm, out_dim), lambda i: (i, 0)),
        compiler_params=pltpu.CompilerParams(dimension_semantics=("parallel",)),
    )(xp, w_big.astype(jnp.bfloat16), b_big.astype(jnp.float32))
    return out[:N]


# ---------------------------------------------------------------------------
# Fused bidirectional recurrent kernel.  Inputs are the PRE-PROJECTED gates
# x_proj (T, B, 8H) = X @ [W_ih_f | W_ih_b] + bias, a (T, B, 1) validity mask,
# and the two recurrent weights.  Both directions run interleaved in one loop.
# Output (T, B, 2H); padded timesteps are written as zeros (pad_packed_sequence).
# ---------------------------------------------------------------------------
def bilstm_recurrent_kernel(xp_ref, m_ref, whh_f_ref, whh_b_ref, out_ref, *, hidden):
    T, B, _ = xp_ref.shape
    H = hidden
    G = 4 * H

    def gate_act(pre):
        # Full-vreg sigmoid + tanh, lane-mask blend (avoids 4 partial EUP pushes).
        lane = lax.broadcasted_iota(jnp.int32, pre.shape, 1)
        is_tanh = (lane >= 2 * H) & (lane < 3 * H)
        act = jnp.where(is_tanh, jnp.tanh(pre), jax.nn.sigmoid(pre))
        return act[:, 0:H], act[:, H:2 * H], act[:, 2 * H:3 * H], act[:, 3 * H:4 * H]

    def cell(pre, h, c, m):
        i_g, f_g, g_g, o_g = gate_act(pre)
        c_new = f_g * c + i_g * g_g
        h_new = o_g * jnp.tanh(c_new)
        h = m * h_new + (1.0 - m) * h              # packed-sequence state freeze
        c = m * c_new + (1.0 - m) * c
        return h, c

    def step(i, carry):
        h_f, c_f, h_b, c_b = carry
        tf = i
        tb = T - 1 - i
        xf = xp_ref[tf]                            # (B, 8H)
        xb = xp_ref[tb]
        m_f = m_ref[tf]                            # (B, 1) f32
        m_b = m_ref[tb]
        pre_f = xf[:, 0:G] + jnp.dot(h_f.astype(jnp.bfloat16), whh_f_ref[...],
                                     preferred_element_type=jnp.float32)
        pre_b = xb[:, G:2 * G] + jnp.dot(h_b.astype(jnp.bfloat16), whh_b_ref[...],
                                         preferred_element_type=jnp.float32)
        h_f, c_f = cell(pre_f, h_f, c_f, m_f)
        h_b, c_b = cell(pre_b, h_b, c_b, m_b)
        # zeros at padded timesteps, matching pad_packed_sequence output.
        out_ref[tf, :, 0:H] = m_f * h_f
        out_ref[tb, :, H:2 * H] = m_b * h_b
        return h_f, c_f, h_b, c_b

    z = jnp.zeros((B, H), jnp.float32)
    lax.fori_loop(0, T, step, (z, z, z, z), unroll=2)


def bilstm_layer_recurrent(x_proj_tm, mask_tm, whh_f, whh_b, hidden):
    T, B, _ = x_proj_tm.shape
    kern = functools.partial(bilstm_recurrent_kernel, hidden=hidden)
    return pl.pallas_call(
        kern,
        out_shape=jax.ShapeDtypeStruct((T, B, 2 * hidden), jnp.float32),
        grid=(1,),
        in_specs=[pl.BlockSpec((T, B, 8 * hidden), lambda i: (0, 0, 0)),
                  pl.BlockSpec((T, B, 1), lambda i: (0, 0, 0)),
                  pl.BlockSpec((hidden, 4 * hidden), lambda i: (0, 0)),
                  pl.BlockSpec((hidden, 4 * hidden), lambda i: (0, 0))],
        out_specs=pl.BlockSpec((T, B, 2 * hidden), lambda i: (0, 0, 0)),
        compiler_params=pltpu.CompilerParams(dimension_semantics=("arbitrary",)),
    )(x_proj_tm, mask_tm, whh_f.astype(jnp.bfloat16), whh_b.astype(jnp.bfloat16))


def bilstm(x_flat_tm, T, B, mask_tm, layer_params, hidden):
    # x_flat_tm: (T*B, D) time-major flattened rows.
    out = None
    for (wih_fb, b_fb, whh_f, whh_b) in layer_params:
        x_proj = linear(x_flat_tm, wih_fb, b_fb)           # (T*B, 8H), proj hoisted
        x_proj = x_proj.reshape(T, B, 8 * hidden)
        out = bilstm_layer_recurrent(x_proj, mask_tm, whh_f, whh_b, hidden)  # (T,B,2H)
        x_flat_tm = out.reshape(T * B, 2 * hidden)
        # TODO(synk): inter-layer LSTM dropout (p=0.6) is training-only; identity here.
    return out                                             # (T, B, 2H)


# ---------------------------------------------------------------------------
# Parameters (deterministic, synthetic — no checkpoint).
# ---------------------------------------------------------------------------
def init_params(key, vocab, char_vocab, pos_vocab, lex, hidden, num_layers, E, num_classes):
    keys = iter(jax.random.split(key, 64))

    def rand(shape, scale=0.1):
        return (scale * jax.random.normal(next(keys), shape)).astype(jnp.float32)

    word2vec = rand((vocab, E))                            # word2vec is not None branch
    params = {
        "embed": word2vec,                                 # frozen copy
        "trainable_embed": word2vec,                       # trainable copy (same init)
        "char_embed": rand((char_vocab, E)).at[0].set(0.0),   # padding_idx=0
        "pos_embed": rand((pos_vocab, E)).at[0].set(0.0),     # padding_idx=0
        "conv_w": [rand((ks, E, KERNEL_NUM)) for ks in KERNEL_SIZES],
        "conv_b": [rand((1, KERNEL_NUM)) for _ in KERNEL_SIZES],
    }
    d_in = KERNEL_NUM * len(KERNEL_SIZES) + 2 * E + E + lex
    lstm = []
    for layer in range(num_layers):
        d = d_in if layer == 0 else 2 * hidden
        wih_f, whh_f, b_f = rand((d, 4 * hidden)), rand((hidden, 4 * hidden)), rand((1, 4 * hidden))
        wih_b, whh_b, b_b = rand((d, 4 * hidden)), rand((hidden, 4 * hidden)), rand((1, 4 * hidden))
        # TODO(synk): a PyTorch checkpoint port must sum b_ih + b_hh into this single bias.
        wih_fb = jnp.concatenate([wih_f, wih_b], axis=1)   # (d, 8H)
        b_fb = jnp.concatenate([b_f, b_b], axis=1)         # (1, 8H)
        lstm.append((wih_fb, b_fb, whh_f, whh_b))
    params["lstm"] = lstm
    params["hidden"] = hidden

    C = num_classes
    Cp = _round_up(C, 128)                                 # lane-dense fc1 output
    fc_w, fc_b = rand((2 * hidden, C)), rand((C,))
    params["fc_w_pad"] = jnp.zeros((2 * hidden, Cp), jnp.float32).at[:, :C].set(fc_w)
    params["fc_b_pad"] = jnp.zeros((Cp,), jnp.float32).at[:C].set(fc_b)
    params["num_classes"] = C
    return params


# ---------------------------------------------------------------------------
# Full forward pass: returns time-major (T, B, num_classes) logits.
# Packed gathering (pack_padded_sequence order) is done by the caller.
# ---------------------------------------------------------------------------
def cnn_bilstm_forward(params, x, x_char, x_pos, x_lex, lengths):
    B, T = x.shape
    L = x_char.shape[2]
    E = params["embed"].shape[1]

    w_emb = params["embed"][x]                             # (B, T, E)
    tw_emb = params["trainable_embed"][x]                  # (B, T, E)
    pos_emb = params["pos_embed"][x_pos]                   # (B, T, E)
    c_emb = params["char_embed"][x_char.reshape(B * T, L)]  # (B*T, L, E)

    w_big, b_big, n_pos_list = build_charcnn_packed(params["conv_w"], params["conv_b"], L, E)
    char_feat = char_cnn(c_emb.reshape(B * T, L * E), w_big, b_big, n_pos_list)  # (B*T, 512)
    char_feat = char_feat.reshape(B, T, -1)

    # nn.Dropout(0.5): identity at inference.  Single concat (one HBM pass).
    enhanced = jnp.concatenate([char_feat, w_emb, tw_emb, pos_emb, x_lex], axis=2)  # (B,T,568)

    enhanced_tm = jnp.transpose(enhanced, (1, 0, 2)).reshape(T * B, -1)   # time-major rows
    mask_tm = (jnp.arange(T)[:, None] < lengths[None, :].astype(jnp.int32))
    mask_tm = mask_tm.astype(jnp.float32).reshape(T, B, 1)

    lstm_out = bilstm(enhanced_tm, T, B, mask_tm, params["lstm"], params["hidden"])  # (T,B,2H)

    logits = linear(lstm_out.reshape(T * B, -1), params["fc_w_pad"], params["fc_b_pad"])
    logits = logits[:, :params["num_classes"]].reshape(T, B, -1)
    return logits


if __name__ == "__main__":
    vocab_size, char_vocab_size, pos_vocab_size = 20, 30, 12
    lex_ner_size, hidden_size, num_layers = 8, 32, 2
    embed_size, num_classes = 16, 5
    B, T, L = 2, 8, 8

    key = jax.random.PRNGKey(0)
    pkey, k1, k2, k3, k4 = jax.random.split(key, 5)
    params = init_params(pkey, vocab_size, char_vocab_size, pos_vocab_size,
                         lex_ner_size, hidden_size, num_layers, embed_size, num_classes)

    x = jax.random.randint(k1, (B, T), 0, vocab_size)
    x_char = jax.random.randint(k2, (B, T, L), 0, char_vocab_size)
    x_pos = jax.random.randint(k3, (B, T), 0, pos_vocab_size)
    x_lex = (0.1 * jax.random.normal(k4, (B, T, lex_ner_size))).astype(jnp.float32)
    lengths = jnp.array([8, 5], dtype=jnp.int32)           # sorted descending (pack requirement)

    logits_tm = cnn_bilstm_forward(params, x, x_char, x_pos, x_lex, lengths)  # (T, B, C)

    # Emulate pack_padded_sequence ordering: time-major, only valid steps.
    lens = np.asarray(lengths)
    pairs = [(t, b) for t in range(T) for b in range(B) if t < lens[b]]
    t_idx = jnp.array([p[0] for p in pairs])
    b_idx = jnp.array([p[1] for p in pairs])
    logit = logits_tm[t_idx, b_idx]                        # (sum(lengths), num_classes)

    jax.block_until_ready(logit)
    assert logit.shape == (int(lens.sum()), num_classes)
    print("KERNEL_OK")
</pallas_src>

<mosaic_0001>
module attributes {stable_mosaic.version = 11 : i64} {
  func.func @char_cnn_kernel(%arg0: i32, %arg1: memref<16x128xbf16, #tpu.memory_space<vmem>>, %arg2: memref<128x2816xbf16, #tpu.memory_space<vmem>>, %arg3: memref<1x2816xf32, #tpu.memory_space<vmem>>, %arg4: memref<16x512xf32, #tpu.memory_space<vmem>>) attributes {dimension_semantics = [#tpu.dimension_semantics<parallel>], iteration_bounds = array<i64: 1>, scalar_prefetch = 0 : i64, scratch_operands = 0 : i64, tpu.core_type = #tpu.core_type<tc>, window_params = [{transform_indices = @transform_0, window_bounds = array<i64: 16, 128>}, {pipeline_mode = #tpu.pipeline_mode<synchronous>, transform_indices = @transform_1, window_bounds = array<i64: 128, 2816>}, {pipeline_mode = #tpu.pipeline_mode<synchronous>, transform_indices = @transform_2, window_bounds = array<i64: 1, 2816>}, {transform_indices = @transform_3, window_bounds = array<i64: 16, 512>}]} {
    %c0 = arith.constant 0 : index
    %c0_0 = arith.constant 0 : index
    %0 = vector.load %arg1[%c0, %c0_0] : memref<16x128xbf16, #tpu.memory_space<vmem>>, vector<16x128xbf16>
    %c0_1 = arith.constant 0 : index
    %c0_2 = arith.constant 0 : index
    %1 = vector.load %arg2[%c0_1, %c0_2] : memref<128x2816xbf16, #tpu.memory_space<vmem>>, vector<128x2816xbf16>
    %cst = arith.constant dense<0.000000e+00> : vector<16x2816xf32>
    %2 = tpu.matmul %0, %1, %cst {dimension_numbers = #tpu.dot_dimension_numbers<[1], [0], [0], [1], [0, 0, 1, 1], [], []>} : vector<16x128xbf16>, vector<128x2816xbf16>, vector<16x2816xf32> -> vector<16x2816xf32>
    %c0_3 = arith.constant 0 : index
    %c0_4 = arith.constant 0 : index
    %3 = vector.load %arg3[%c0_3, %c0_4] : memref<1x2816xf32, #tpu.memory_space<vmem>>, vector<1x2816xf32>
    %4 = vector.broadcast %3 : vector<1x2816xf32> to vector<16x2816xf32>
    %5 = arith.addf %2, %4 : vector<16x2816xf32>
    %cst_5 = arith.constant 0.000000e+00 : f32
    %6 = vector.broadcast %cst_5 : f32 to vector<16x2816xf32>
    %7 = arith.maximumf %5, %6 : vector<16x2816xf32>
    %8 = vector.extract_strided_slice %7 {offsets = [0, 0], sizes = [16, 128], strides = [1, 1]} : vector<16x2816xf32> to vector<16x128xf32>
    %9 = vector.extract_strided_slice %7 {offsets = [0, 128], sizes = [16, 128], strides = [1, 1]} : vector<16x2816xf32> to vector<16x128xf32>
    %10 = arith.maximumf %8, %9 : vector<16x128xf32>
    %11 = vector.extract_strided_slice %7 {offsets = [0, 256], sizes = [16, 128], strides = [1, 1]} : vector<16x2816xf32> to vector<16x128xf32>
    %12 = arith.maximumf %10, %11 : vector<16x128xf32>
    %13 = vector.extract_strided_slice %7 {offsets = [0, 384], sizes = [16, 128], strides = [1, 1]} : vector<16x2816xf32> to vector<16x128xf32>
    %14 = arith.maximumf %12, %13 : vector<16x128xf32>
    %15 = vector.extract_strided_slice %7 {offsets = [0, 512], sizes = [16, 128], strides = [1, 1]} : vector<16x2816xf32> to vector<16x128xf32>
    %16 = arith.maximumf %14, %15 : vector<16x128xf32>
    %17 = vector.extract_strided_slice %7 {offsets = [0, 640], sizes = [16, 128], strides = [1, 1]} : vector<16x2816xf32> to vector<16x128xf32>
    %18 = arith.maximumf %16, %17 : vector<16x128xf32>
    %19 = vector.extract_strided_slice %7 {offsets = [0, 768], sizes = [16, 128], strides = [1, 1]} : vector<16x2816xf32> to vector<16x128xf32>
    %20 = arith.maximumf %18, %19 : vector<16x128xf32>
    %c0_6 = arith.constant 0 : index
    %c0_7 = arith.constant 0 : index
    %21 = vector.load %arg4[%c0_6, %c0_7] : memref<16x512xf32, #tpu.memory_space<vmem>>, vector<16x128xf32>
    tpu.vector_store %arg4[%c0_6, %c0_7], %20 {strides = array<i32>} : memref<16x512xf32, #tpu.memory_space<vmem>>, vector<16x128xf32>,
    %22 = vector.extract_strided_slice %7 {offsets = [0, 896], sizes = [16, 128], strides = [1, 1]} : vector<16x2816xf32> to vector<16x128xf32>
    %23 = vector.extract_strided_slice %7 {offsets = [0, 1024], sizes = [16, 128], strides = [1, 1]} : vector<16x2816xf32> to vector<16x128xf32>
    %24 = arith.maximumf %22, %23 : vector<16x128xf32>
    %25 = vector.extract_strided_slice %7 {offsets = [0, 1152], sizes = [16, 128], strides = [1, 1]} : vector<16x2816xf32> to vector<16x128xf32>
    %26 = arith.maximumf %24, %25 : vector<16x128xf32>
    %27 = vector.extract_strided_slice %7 {offsets = [0, 1280], sizes = [16, 128], strides = [1, 1]} : vector<16x2816xf32> to vector<16x128xf32>
    %28 = arith.maximumf %26, %27 : vector<16x128xf32>
    %29 = vector.extract_strided_slice %7 {offsets = [0, 1408], sizes = [16, 128], strides = [1, 1]} : vector<16x2816xf32> to vector<16x128xf32>
    %30 = arith.maximumf %28, %29 : vector<16x128xf32>
    %31 = vector.extract_strided_slice %7 {offsets = [0, 1536], sizes = [16, 128], strides = [1, 1]} : vector<16x2816xf32> to vector<16x128xf32>
    %32 = arith.maximumf %30, %31 : vector<16x128xf32>
    %c0_8 = arith.constant 0 : index
    %c128 = arith.constant 128 : index
    %33 = vector.load %arg4[%c0_8, %c128] : memref<16x512xf32, #tpu.memory_space<vmem>>, vector<16x128xf32>
    tpu.vector_store %arg4[%c0_8, %c128], %32 {strides = array<i32>} : memref<16x512xf32, #tpu.memory_space<vmem>>, vector<16x128xf32>,
    %34 = vector.extract_strided_slice %7 {offsets = [0, 1664], sizes = [16, 128], strides = [1, 1]} : vector<16x2816xf32> to vector<16x128xf32>
    %35 = vector.extract_strided_slice %7 {offsets = [0, 1792], sizes = [16, 128], strides = [1, 1]} : vector<16x2816xf32> to vector<16x128xf32>
    %36 = arith.maximumf %34, %35 : vector<16x128xf32>
    %37 = vector.extract_strided_slice %7 {offsets = [0, 1920], sizes = [16, 128], strides = [1, 1]} : vector<16x2816xf32> to vector<16x128xf32>
    %38 = arith.maximumf %36, %37 : vector<16x128xf32>
    %39 = vector.extract_strided_slice %7 {offsets = [0, 2048], sizes = [16, 128], strides = [1, 1]} : vector<16x2816xf32> to vector<16x128xf32>
    %40 = arith.maximumf %38, %39 : vector<16x128xf32>
    %41 = vector.extract_strided_slice %7 {offsets = [0, 2176], sizes = [16, 128], strides = [1, 1]} : vector<16x2816xf32> to vector<16x128xf32>
    %42 = arith.maximumf %40, %41 : vector<16x128xf32>
    %c0_9 = arith.constant 0 : index
    %c256 = arith.constant 256 : index
    %43 = vector.load %arg4[%c0_9, %c256] : memref<16x512xf32, #tpu.memory_space<vmem>>, vector<16x128xf32>
    tpu.vector_store %arg4[%c0_9, %c256], %42 {strides = array<i32>} : memref<16x512xf32, #tpu.memory_space<vmem>>, vector<16x128xf32>,
    %44 = vector.extract_strided_slice %7 {offsets = [0, 2304], sizes = [16, 128], strides = [1, 1]} : vector<16x2816xf32> to vector<16x128xf32>
    %45 = vector.extract_strided_slice %7 {offsets = [0, 2432], sizes = [16, 128], strides = [1, 1]} : vector<16x2816xf32> to vector<16x128xf32>
    %46 = arith.maximumf %44, %45 : vector<16x128xf32>
    %47 = vector.extract_strided_slice %7 {offsets = [0, 2560], sizes = [16, 128], strides = [1, 1]} : vector<16x2816xf32> to vector<16x128xf32>
    %48 = arith.maximumf %46, %47 : vector<16x128xf32>
    %49 = vector.extract_strided_slice %7 {offsets = [0, 2688], sizes = [16, 128], strides = [1, 1]} : vector<16x2816xf32> to vector<16x128xf32>
    %50 = arith.maximumf %48, %49 : vector<16x128xf32>
    %c0_10 = arith.constant 0 : index
    %c384 = arith.constant 384 : index
    %51 = vector.load %arg4[%c0_10, %c384] : memref<16x512xf32, #tpu.memory_space<vmem>>, vector<16x128xf32>
    tpu.vector_store %arg4[%c0_10, %c384], %50 {strides = array<i32>} : memref<16x512xf32, #tpu.memory_space<vmem>>, vector<16x128xf32>,
    return
  }
  func.func @transform_0(%arg0: i32) -> (i32, i32) {
    %c0_i32 = arith.constant 0 : i32
    %c0_i32_0 = arith.constant 0 : i32
    return %arg0, %c0_i32 : i32, i32
  }
  func.func @transform_1(%arg0: i32) -> (i32, i32) {
    %c0_i32 = arith.constant 0 : i32
    %c0_i32_0 = arith.constant 0 : i32
    %c0_i32_1 = arith.constant 0 : i32
    return %c0_i32, %c0_i32_0 : i32, i32
  }
  func.func @transform_2(%arg0: i32) -> (i32, i32) {
    %c0_i32 = arith.constant 0 : i32
    %c0_i32_0 = arith.constant 0 : i32
    %c0_i32_1 = arith.constant 0 : i32
    return %c0_i32, %c0_i32_0 : i32, i32
  }
  func.func @transform_3(%arg0: i32) -> (i32, i32) {
    %c0_i32 = arith.constant 0 : i32
    %c0_i32_0 = arith.constant 0 : i32
    return %arg0, %c0_i32 : i32, i32
  }
}

</mosaic_0001>

<llo_original>
// kernel: tpu_custom_call.1
$region0: #{tpu_custom_call.1}
  #allocation0 [shape = 'u32[]', space=smem, size = 0x4, offset = 0x4, fixed_abs, tag = 'smem constant byte address 0x4 - core index']
  #allocation1 [shape = 'u32[72,128]{1,0:T(1,128)}', space=vmem, size = 0x9000, scoped, tag = 'internal scratch']
  %s0 = inlined_call_operand.hbm [shape: bf16[16,128], index: 0, kind: input, shape index: {}]
  %s1 = inlined_call_operand.hbm [shape: bf16[128,2816], index: 1, kind: input, shape index: {}]
  %s2 = inlined_call_operand.hbm [shape: f32[1,2816], index: 2, kind: input, shape index: {}]
  %s3 = inlined_call_operand.hbm [shape: f32[16,512], index: 3, kind: output, shape index: {}]
  %s4 = sld [smem:[#allocation0]]
  $region34: #{tpu_custom_call.1} parent=0
    _
  %s6 = ssub.s32 1, %s4
  %s7 = scalar_select 0, %s6, %s4
  $region1: #{tpu_custom_call.1} parent=0
    #allocation2 [shape = 'u8[4096]{0}', space=vmem, size = 0x1000, scoped, tag = 'input window, operand 0, single buffered']
    #allocation3 [shape = 's32[1]{0}', space=sflag, size = 0x4, scoped, tag = 'scoped memory for tpu_custom_call.1']
    #allocation4 [shape = 's32[1]{0}', space=sflag, size = 0x4, scoped, tag = 'scoped memory for tpu_custom_call.1']
    #allocation5 [shape = 'u8[720896]{0}', space=vmem, size = 0xb0000, scoped, tag = 'input window, operand 1, single buffered']
    #allocation6 [shape = 's32[1]{0}', space=sflag, size = 0x4, scoped, tag = 'scoped memory for tpu_custom_call.1']
    #allocation7 [shape = 'u8[11264]{0}', space=vmem, size = 0x2c00, scoped, tag = 'input window, operand 2, single buffered']
    #allocation8 [shape = 'u8[32768]{0}', space=vmem, size = 0x8000, scoped, tag = 'output window, operand 0, single buffered']
    %8 = vsyncpa [#allocation3], 0
    %9 = vsyncpa [#allocation6], 0
    %10 = vsyncpa [#allocation4], 0
    // Predicated region
    $region2: #{tpu_custom_call.1} parent=1 // pred_check
      _
    $region3: #{tpu_custom_call.1} parent=1 // pred_check_branch
      %12 = sbr.rel (0) target = $region5
    $region4: #{tpu_custom_call.1} parent=1 // pred_region
      %14 = vsyncadd [#allocation3], 0
      %s15 = sshll.u32 %s0, 4
      %s16 = int_to_ptr.hbm [resolvable:$true] %s15
      %s17 = sshll.u32 [#allocation2], 4
      %s18 = int_to_ptr.vmem [resolvable:$true] %s17
      %23 = dma.hbm_to_vmem [thread:$0]  %s16, 128, %s18, [#allocation3], 64, 64, 4
    $region5: #{tpu_custom_call.1} parent=1 // pred_fallthru
      _
    // Predicated region
    $region6: #{tpu_custom_call.1} parent=1 // pred_check
      _
    $region7: #{tpu_custom_call.1} parent=1 // pred_check_branch
      %25 = sbr.rel (0) target = $region9
    $region8: #{tpu_custom_call.1} parent=1 // pred_region
      %27 = vsyncadd [#allocation6], 0
      %s28 = sshll.u32 %s1, 4
      %s29 = int_to_ptr.hbm [resolvable:$true] %s28
      %s30 = sshll.u32 [#allocation5], 4
      %s31 = int_to_ptr.vmem [resolvable:$true] %s30
      %36 = dma.hbm_to_vmem [thread:$0]  %s29, 22528, %s31, [#allocation6], 1408, 1408, 88
    $region9: #{tpu_custom_call.1} parent=1 // pred_fallthru
      _
    // Predicated region
    $region10: #{tpu_custom_call.1} parent=1 // pred_check
      _
    $region11: #{tpu_custom_call.1} parent=1 // pred_check_branch
      %38 = sbr.rel (0) target = $region13
    $region12: #{tpu_custom_call.1} parent=1 // pred_region
      %40 = vsyncadd [#allocation6], 0
      %s42 = sshll.u32 %s2, 4
      %s43 = int_to_ptr.hbm [resolvable:$true] %s42
      %s44 = sshll.u32 [#allocation7], 4
      %s45 = int_to_ptr.vmem [resolvable:$true] %s44
      %47 = dma.hbm_to_vmem [thread:$0]  %s43, 352, %s45, [#allocation6]
    $region13: #{tpu_custom_call.1} parent=1 // pred_fallthru
      _
    // Predicated region
    $region14: #{tpu_custom_call.1} parent=1 // pred_check
      _
    $region15: #{tpu_custom_call.1} parent=1 // pred_check_branch
      %49 = sbr.rel (0) target = $region17
    $region16: #{tpu_custom_call.1} parent=1 // pred_region
      %51 = dma.done [#allocation3], 128
    $region17: #{tpu_custom_call.1} parent=1 // pred_fallthru
      _
    // Predicated region
    $region18: #{tpu_custom_call.1} parent=1 // pred_check
      _
    $region19: #{tpu_custom_call.1} parent=1 // pred_check_branch
      %53 = sbr.rel (0) target = $region21
    $region20: #{tpu_custom_call.1} parent=1 // pred_region
      %55 = dma.done [#allocation6], 22528
    $region21: #{tpu_custom_call.1} parent=1 // pred_fallthru
      _
    // Predicated region
    $region22: #{tpu_custom_call.1} parent=1 // pred_check
      _
    $region23: #{tpu_custom_call.1} parent=1 // pred_check_branch
      %57 = sbr.rel (0) target = $region25
    $region24: #{tpu_custom_call.1} parent=1 // pred_region
      %59 = dma.done [#allocation6], 352
    $region25: #{tpu_custom_call.1} parent=1 // pred_fallthru
      _
    %v60 = vld [vmem:[#allocation2] sm:$0xf]
    %v61 = vld [vmem:[#allocation2 + $0x4] sm:$0xf]
    %v62 = vld [vmem:[#allocation5] sm:$0xff]
    %v63 = vld [vmem:[#allocation5 + $0x8] sm:$0xff]
    %v64 = vld [vmem:[#allocation5 + $0x10] sm:$0xff]
    %v65 = vld [vmem:[#allocation5 + $0x18] sm:$0xff]
    %v66 = vld [vmem:[#allocation5 + $0x20] sm:$0xff]
    %v67 = vld [vmem:[#allocation5 + $0x28] sm:$0xff]
    %v68 = vld [vmem:[#allocation5 + $0x30] sm:$0xff]
    %v69 = vld [vmem:[#allocation5 + $0x38] sm:$0xff]
    %v70 = vld [vmem:[#allocation5 + $0x40] sm:$0xff]
    %v71 = vld [vmem:[#allocation5 + $0x48] sm:$0xff]
    %v72 = vld [vmem:[#allocation5 + $0x50] sm:$0xff]
    %v73 = vld [vmem:[#allocation5 + $0x58] sm:$0xff]
    %v74 = vld [vmem:[#allocation5 + $0x60] sm:$0xff]
    %v75 = vld [vmem:[#allocation5 + $0x68] sm:$0xff]
    %v76 = vld [vmem:[#allocation5 + $0x70] sm:$0xff]
    %v77 = vld [vmem:[#allocation5 + $0x78] sm:$0xff]
    %v78 = vld [vmem:[#allocation5 + $0x80] sm:$0xff]
    %v79 = vld [vmem:[#allocation5 + $0x88] sm:$0xff]
    %v80 = vld [vmem:[#allocation5 + $0x90] sm:$0xff]
    %v81 = vld [vmem:[#allocation5 + $0x98] sm:$0xff]
    %v82 = vld [vmem:[#allocation5 + $0xa0] sm:$0xff]
    %v83 = vld [vmem:[#allocation5 + $0xa8] sm:$0xff]
    %v84 = vld [vmem:[#allocation5 + $0xb0] sm:$0xff]
    %v85 = vld [vmem:[#allocation5 + $0xb8] sm:$0xff]
    %v86 = vld [vmem:[#allocation5 + $0xc0] sm:$0xff]
    %v87 = vld [vmem:[#allocation5 + $0xc8] sm:$0xff]
    %v88 = vld [vmem:[#allocation5 + $0xd0] sm:$0xff]
    %v89 = vld [vmem:[#allocation5 + $0xd8] sm:$0xff]
    %v90 = vld [vmem:[#allocation5 + $0xe0] sm:$0xff]
    %v91 = vld [vmem:[#allocation5 + $0xe8] sm:$0xff]
    %v92 = vld [vmem:[#allocation5 + $0xf0] sm:$0xff]
    %v93 = vld [vmem:[#allocation5 + $0xf8] sm:$0xff]
    %v94 = vld [vmem:[#allocation5 + $0x100] sm:$0xff]
    %v95 = vld [vmem:[#allocation5 + $0x108] sm:$0xff]
    %v96 = vld [vmem:[#allocation5 + $0x110] sm:$0xff]
    %v97 = vld [vmem:[#allocation5 + $0x118] sm:$0xff]
    %v98 = vld [vmem:[#allocation5 + $0x120] sm:$0xff]
    %v99 = vld [vmem:[#allocation5 + $0x128] sm:$0xff]
    %v100 = vld [vmem:[#allocation5 + $0x130] sm:$0xff]
    %v101 = vld [vmem:[#allocation5 + $0x138] sm:$0xff]
    %v102 = vld [vmem:[#allocation5 + $0x140] sm:$0xff]
    %v103 = vld [vmem:[#allocation5 + $0x148] sm:$0xff]
    %v104 = vld [vmem:[#allocation5 + $0x150] sm:$0xff]
    %v105 = vld [vmem:[#allocation5 + $0x158] sm:$0xff]
    %v106 = vld [vmem:[#allocation5 + $0x160] sm:$0xff]
    %v107 = vld [vmem:[#allocation5 + $0x168] sm:$0xff]
    %v108 = vld [vmem:[#allocation5 + $0x170] sm:$0xff]
    %v109 = vld [vmem:[#allocation5 + $0x178] sm:$0xff]
    %v110 = vld [vmem:[#allocation5 + $0x180] sm:$0xff]
    %v111 = vld [vmem:[#allocation5 + $0x188] sm:$0xff]
    %v112 = vld [vmem:[#allocation5 + $0x190] sm:$0xff]
    %v113 = vld [vmem:[#allocation5 + $0x198] sm:$0xff]
    %v114 = vld [vmem:[#allocation5 + $0x1a0] sm:$0xff]
    %v115 = vld [vmem:[#allocation5 + $0x1a8] sm:$0xff]
    %v116 = vld [vmem:[#allocation5 + $0x1b0] sm:$0xff]
    %v117 = vld [vmem:[#allocation5 + $0x1b8] sm:$0xff]
    %v118 = vld [vmem:[#allocation5 + $0x1c0] sm:$0xff]
    %v119 = vld [vmem:[#allocation5 + $0x1c8] sm:$0xff]
    %v120 = vld [vmem:[#allocation5 + $0x1d0] sm:$0xff]
    %v121 = vld [vmem:[#allocation5 + $0x1d8] sm:$0xff]
    %v122 = vld [vmem:[#allocation5 + $0x1e0] sm:$0xff]
    %v123 = vld [vmem:[#allocation5 + $0x1e8] sm:$0xff]
    %v124 = vld [vmem:[#allocation5 + $0x1f0] sm:$0xff]
    %v125 = vld [vmem:[#allocation5 + $0x1f8] sm:$0xff]
    %v126 = vld [vmem:[#allocation5 + $0x200] sm:$0xff]
    %v127 = vld [vmem:[#allocation5 + $0x208] sm:$0xff]
    %v128 = vld [vmem:[#allocation5 + $0x210] sm:$0xff]
    %v129 = vld [vmem:[#allocation5 + $0x218] sm:$0xff]
    %v130 = vld [vmem:[#allocation5 + $0x220] sm:$0xff]
    %v131 = vld [vmem:[#allocation5 + $0x228] sm:$0xff]
    %v132 = vld [vmem:[#allocation5 + $0x230] sm:$0xff]
    %v133 = vld [vmem:[#allocation5 + $0x238] sm:$0xff]
    %v134 = vld [vmem:[#allocation5 + $0x240] sm:$0xff]
    %v135 = vld [vmem:[#allocation5 + $0x248] sm:$0xff]
    %v136 = vld [vmem:[#allocation5 + $0x250] sm:$0xff]
    %v137 = vld [vmem:[#allocation5 + $0x258] sm:$0xff]
    %v138 = vld [vmem:[#allocation5 + $0x260] sm:$0xff]
    %v139 = vld [vmem:[#allocation5 + $0x268] sm:$0xff]
    %v140 = vld [vmem:[#allocation5 + $0x270] sm:$0xff]
    %v141 = vld [vmem:[#allocation5 + $0x278] sm:$0xff]
    %v142 = vld [vmem:[#allocation5 + $0x280] sm:$0xff]
    %v143 = vld [vmem:[#allocation5 + $0x288] sm:$0xff]
    %v144 = vld [vmem:[#allocation5 + $0x290] sm:$0xff]
    %v145 = vld [vmem:[#allocation5 + $0x298] sm:$0xff]
    %v146 = vld [vmem:[#allocation5 + $0x2a0] sm:$0xff]
    %v147 = vld [vmem:[#allocation5 + $0x2a8] sm:$0xff]
    %v148 = vld [vmem:[#allocation5 + $0x2b0] sm:$0xff]
    %v149 = vld [vmem:[#allocation5 + $0x2b8] sm:$0xff]
    %v150 = vld [vmem:[#allocation5 + $0x2c0] sm:$0xff]
    %v151 = vld [vmem:[#allocation5 + $0x2c8] sm:$0xff]
    %v152 = vld [vmem:[#allocation5 + $0x2d0] sm:$0xff]
    %v153 = vld [vmem:[#allocation5 + $0x2d8] sm:$0xff]
    %v154 = vld [vmem:[#allocation5 + $0x2e0] sm:$0xff]
    %v155 = vld [vmem:[#allocation5 + $0x2e8] sm:$0xff]
    %v156 = vld [vmem:[#allocation5 + $0x2f0] sm:$0xff]
    %v157 = vld [vmem:[#allocation5 + $0x2f8] sm:$0xff]
    %v158 = vld [vmem:[#allocation5 + $0x300] sm:$0xff]
    %v159 = vld [vmem:[#allocation5 + $0x308] sm:$0xff]
    %v160 = vld [vmem:[#allocation5 + $0x310] sm:$0xff]
    %v161 = vld [vmem:[#allocation5 + $0x318] sm:$0xff]
    %v162 = vld [vmem:[#allocation5 + $0x320] sm:$0xff]
    %v163 = vld [vmem:[#allocation5 + $0x328] sm:$0xff]
    %v164 = vld [vmem:[#allocation5 + $0x330] sm:$0xff]
    %v165 = vld [vmem:[#allocation5 + $0x338] sm:$0xff]
    %v166 = vld [vmem:[#allocation5 + $0x340] sm:$0xff]
    %v167 = vld [vmem:[#allocation5 + $0x348] sm:$0xff]
    %v168 = vld [vmem:[#allocation5 + $0x350] sm:$0xff]
    %v169 = vld [vmem:[#allocation5 + $0x358] sm:$0xff]
    %v170 = vld [vmem:[#allocation5 + $0x360] sm:$0xff]
    %v171 = vld [vmem:[#allocation5 + $0x368] sm:$0xff]
    %v172 = vld [vmem:[#allocation5 + $0x370] sm:$0xff]
    %v173 = vld [vmem:[#allocation5 + $0x378] sm:$0xff]
    %v174 = vld [vmem:[#allocation5 + $0x380] sm:$0xff]
    %v175 = vld [vmem:[#allocation5 + $0x388] sm:$0xff]
    %v176 = vld [vmem:[#allocation5 + $0x390] sm:$0xff]
    %v177 = vld [vmem:[#allocation5 + $0x398] sm:$0xff]
    %v178 = vld [vmem:[#allocation5 + $0x3a0] sm:$0xff]
    %v179 = vld [vmem:[#allocation5 + $0x3a8] sm:$0xff]
    %v180 = vld [vmem:[#allocation5 + $0x3b0] sm:$0xff]
    %v181 = vld [vmem:[#allocation5 + $0x3b8] sm:$0xff]
    %v182 = vld [vmem:[#allocation5 + $0x3c0] sm:$0xff]
    %v183 = vld [vmem:[#allocation5 + $0x3c8] sm:$0xff]
    %v184 = vld [vmem:[#allocation5 + $0x3d0] sm:$0xff]
    %v185 = vld [vmem:[#allocation5 + $0x3d8] sm:$0xff]
    %v186 = vld [vmem:[#allocation5 + $0x3e0] sm:$0xff]
    %v187 = vld [vmem:[#allocation5 + $0x3e8] sm:$0xff]
    %v188 = vld [vmem:[#allocation5 + $0x3f0] sm:$0xff]
    %v189 = vld [vmem:[#allocation5 + $0x3f8] sm:$0xff]
    %v190 = vld [vmem:[#allocation5 + $0x400] sm:$0xff]
    %v191 = vld [vmem:[#allocation5 + $0x408] sm:$0xff]
    %v192 = vld [vmem:[#allocation5 + $0x410] sm:$0xff]
    %v193 = vld [vmem:[#allocation5 + $0x418] sm:$0xff]
    %v194 = vld [vmem:[#allocation5 + $0x420] sm:$0xff]
    %v195 = vld [vmem:[#allocation5 + $0x428] sm:$0xff]
    %v196 = vld [vmem:[#allocation5 + $0x430] sm:$0xff]
    %v197 = vld [vmem:[#allocation5 + $0x438] sm:$0xff]
    %v198 = vld [vmem:[#allocation5 + $0x440] sm:$0xff]
    %v199 = vld [vmem:[#allocation5 + $0x448] sm:$0xff]
    %v200 = vld [vmem:[#allocation5 + $0x450] sm:$0xff]
    %v201 = vld [vmem:[#allocation5 + $0x458] sm:$0xff]
    %v202 = vld [vmem:[#allocation5 + $0x460] sm:$0xff]
    %v203 = vld [vmem:[#allocation5 + $0x468] sm:$0xff]
    %v204 = vld [vmem:[#allocation5 + $0x470] sm:$0xff]
    %v205 = vld [vmem:[#allocation5 + $0x478] sm:$0xff]
    %v206 = vld [vmem:[#allocation5 + $0x480] sm:$0xff]
    %v207 = vld [vmem:[#allocation5 + $0x488] sm:$0xff]
    %v208 = vld [vmem:[#allocation5 + $0x490] sm:$0xff]
    %v209 = vld [vmem:[#allocation5 + $0x498] sm:$0xff]
    %v210 = vld [vmem:[#allocation5 + $0x4a0] sm:$0xff]
    %v211 = vld [vmem:[#allocation5 + $0x4a8] sm:$0xff]
    %v212 = vld [vmem:[#allocation5 + $0x4b0] sm:$0xff]
    %v213 = vld [vmem:[#allocation5 + $0x4b8] sm:$0xff]
    %v214 = vld [vmem:[#allocation5 + $0x4c0] sm:$0xff]
    %v215 = vld [vmem:[#allocation5 + $0x4c8] sm:$0xff]
    %v216 = vld [vmem:[#allocation5 + $0x4d0] sm:$0xff]
    %v217 = vld [vmem:[#allocation5 + $0x4d8] sm:$0xff]
    %v218 = vld [vmem:[#allocation5 + $0x4e0] sm:$0xff]
    %v219 = vld [vmem:[#allocation5 + $0x4e8] sm:$0xff]
    %v220 = vld [vmem:[#allocation5 + $0x4f0] sm:$0xff]
    %v221 = vld [vmem:[#allocation5 + $0x4f8] sm:$0xff]
    %v222 = vld [vmem:[#allocation5 + $0x500] sm:$0xff]
    %v223 = vld [vmem:[#allocation5 + $0x508] sm:$0xff]
    %v224 = vld [vmem:[#allocation5 + $0x510] sm:$0xff]
    %v225 = vld [vmem:[#allocation5 + $0x518] sm:$0xff]
    %v226 = vld [vmem:[#allocation5 + $0x520] sm:$0xff]
    %v227 = vld [vmem:[#allocation5 + $0x528] sm:$0xff]
    %v228 = vld [vmem:[#allocation5 + $0x530] sm:$0xff]
    %v229 = vld [vmem:[#allocation5 + $0x538] sm:$0xff]
    %v230 = vld [vmem:[#allocation5 + $0x540] sm:$0xff]
    %v231 = vld [vmem:[#allocation5 + $0x548] sm:$0xff]
    %v232 = vld [vmem:[#allocation5 + $0x550] sm:$0xff]
    %v233 = vld [vmem:[#allocation5 + $0x558] sm:$0xff]
    %v234 = vld [vmem:[#allocation5 + $0x560] sm:$0xff]
    %v235 = vld [vmem:[#allocation5 + $0x568] sm:$0xff]
    %v236 = vld [vmem:[#allocation5 + $0x570] sm:$0xff]
    %v237 = vld [vmem:[#allocation5 + $0x578] sm:$0xff]
    %v238 = vld [vmem:[#allocation7] sm:$0xff]
    %v239 = vld [vmem:[#allocation7 + $0x8] sm:$0xff]
    %v240 = vld [vmem:[#allocation7 + $0x10] sm:$0x3f]
    %v244 = vperm.slane %v238, 0
    %v245 = vperm.slane %v238, 1
    %v246 = vperm.slane %v238, 2
    %v247 = vperm.slane %v238, 3
    %v248 = vperm.slane %v238, 4
    %v249 = vperm.slane %v238, 5
    %v250 = vperm.slane %v238, 6
    %v251 = vperm.slane %v238, 7
    %v252 = vperm.slane %v239, 0
    %v253 = vperm.slane %v239, 1
    %v254 = vperm.slane %v239, 2
    %v255 = vperm.slane %v239, 3
    %v256 = vperm.slane %v239, 4
    %v257 = vperm.slane %v239, 5
    %v258 = vperm.slane %v239, 6
    %v259 = vperm.slane %v239, 7
    %v260 = vperm.slane %v240, 0
    %v261 = vperm.slane %v240, 1
    %v262 = vperm.slane %v240, 2
    %v263 = vperm.slane %v240, 3
    %v264 = vperm.slane %v240, 4
    %v265 = vperm.slane %v240, 5
    %v290 = vunpack.c.l.b16 %v60
    %v291 = vunpack.c.l.b16 %v61
    %v292 = vpack.c.b16 %v291, %v290
    %v470 = vunpack.c.l.b16 %v62
    %v471 = vunpack.c.h.b16 %v62
    %v472 = vunpack.c.l.b16 %v63
    %v473 = vunpack.c.h.b16 %v63
    %v474 = vunpack.c.l.b16 %v64
    %v475 = vunpack.c.h.b16 %v64
    %v476 = vunpack.c.l.b16 %v65
    %v477 = vunpack.c.h.b16 %v65
    %v478 = vunpack.c.l.b16 %v66
    %v479 = vunpack.c.h.b16 %v66
    %v480 = vunpack.c.l.b16 %v67
    %v481 = vunpack.c.h.b16 %v67
    %v482 = vunpack.c.l.b16 %v68
    %v483 = vunpack.c.h.b16 %v68
    %v484 = vunpack.c.l.b16 %v69
    %v485 = vunpack.c.h.b16 %v69
    %v486 = vunpack.c.l.b16 %v70
    %v487 = vunpack.c.h.b16 %v70
    %v488 = vunpack.c.l.b16 %v71
    %v489 = vunpack.c.h.b16 %v71
    %v490 = vunpack.c.l.b16 %v72
    %v491 = vunpack.c.h.b16 %v72
    %v492 = vunpack.c.l.b16 %v73
    %v493 = vunpack.c.h.b16 %v73
    %v494 = vunpack.c.l.b16 %v74
    %v495 = vunpack.c.h.b16 %v74
    %v496 = vunpack.c.l.b16 %v75
    %v497 = vunpack.c.h.b16 %v75
    %v498 = vunpack.c.l.b16 %v76
    %v499 = vunpack.c.h.b16 %v76
    %v500 = vunpack.c.l.b16 %v77
    %v501 = vunpack.c.h.b16 %v77
    %v502 = vunpack.c.l.b16 %v78
    %v503 = vunpack.c.h.b16 %v78
    %v504 = vunpack.c.l.b16 %v79
    %v505 = vunpack.c.h.b16 %v79
    %v506 = vunpack.c.l.b16 %v80
    %v507 = vunpack.c.h.b16 %v80
    %v508 = vunpack.c.l.b16 %v81
    %v509 = vunpack.c.h.b16 %v81
    %v510 = vunpack.c.l.b16 %v82
    %v511 = vunpack.c.h.b16 %v82
    %v512 = vunpack.c.l.b16 %v83
    %v513 = vunpack.c.h.b16 %v83
    %v514 = vunpack.c.l.b16 %v84
    %v515 = vunpack.c.h.b16 %v84
    %v516 = vunpack.c.l.b16 %v85
    %v517 = vunpack.c.h.b16 %v85
    %v518 = vunpack.c.l.b16 %v86
    %v519 = vunpack.c.h.b16 %v86
    %v520 = vunpack.c.l.b16 %v87
    %v521 = vunpack.c.h.b16 %v87
    %v522 = vunpack.c.l.b16 %v88
    %v523 = vunpack.c.h.b16 %v88
    %v524 = vunpack.c.l.b16 %v89
    %v525 = vunpack.c.h.b16 %v89
    %v526 = vunpack.c.l.b16 %v90
    %v527 = vunpack.c.h.b16 %v90
    %v528 = vunpack.c.l.b16 %v91
    %v529 = vunpack.c.h.b16 %v91
    %v530 = vunpack.c.l.b16 %v92
    %v531 = vunpack.c.h.b16 %v92
    %v532 = vunpack.c.l.b16 %v93
    %v533 = vunpack.c.h.b16 %v93
    %v534 = vunpack.c.l.b16 %v94
    %v535 = vunpack.c.h.b16 %v94
    %v536 = vunpack.c.l.b16 %v95
    %v537 = vunpack.c.h.b16 %v95
    %v538 = vunpack.c.l.b16 %v96
    %v539 = vunpack.c.h.b16 %v96
    %v540 = vunpack.c.l.b16 %v97
    %v541 = vunpack.c.h.b16 %v97
    %v542 = vunpack.c.l.b16 %v98
    %v543 = vunpack.c.h.b16 %v98
    %v544 = vunpack.c.l.b16 %v99
    %v545 = vunpack.c.h.b16 %v99
    %v546 = vunpack.c.l.b16 %v100
    %v547 = vunpack.c.h.b16 %v100
    %v548 = vunpack.c.l.b16 %v101
    %v549 = vunpack.c.h.b16 %v101
    %v550 = vunpack.c.l.b16 %v102
    %v551 = vunpack.c.h.b16 %v102
    %v552 = vunpack.c.l.b16 %v103
    %v553 = vunpack.c.h.b16 %v103
    %v554 = vunpack.c.l.b16 %v104
    %v555 = vunpack.c.h.b16 %v104
    %v556 = vunpack.c.l.b16 %v105
    %v557 = vunpack.c.h.b16 %v105
    %v558 = vunpack.c.l.b16 %v106
    %v559 = vunpack.c.h.b16 %v106
    %v560 = vunpack.c.l.b16 %v107
    %v561 = vunpack.c.h.b16 %v107
    %v562 = vunpack.c.l.b16 %v108
    %v563 = vunpack.c.h.b16 %v108
    %v564 = vunpack.c.l.b16 %v109
    %v565 = vunpack.c.h.b16 %v109
    %v566 = vunpack.c.l.b16 %v110
    %v567 = vunpack.c.h.b16 %v110
    %v568 = vunpack.c.l.b16 %v111
    %v569 = vunpack.c.h.b16 %v111
    %v570 = vunpack.c.l.b16 %v112
    %v571 = vunpack.c.h.b16 %v112
    %v572 = vunpack.c.l.b16 %v113
    %v573 = vunpack.c.h.b16 %v113
    %v574 = vunpack.c.l.b16 %v114
    %v575 = vunpack.c.h.b16 %v114
    %v576 = vunpack.c.l.b16 %v115
    %v577 = vunpack.c.h.b16 %v115
    %v578 = vunpack.c.l.b16 %v116
    %v579 = vunpack.c.h.b16 %v116
    %v580 = vunpack.c.l.b16 %v117
    %v581 = vunpack.c.h.b16 %v117
    %v582 = vunpack.c.l.b16 %v118
    %v583 = vunpack.c.h.b16 %v118
    %v584 = vunpack.c.l.b16 %v119
    %v585 = vunpack.c.h.b16 %v119
    %v586 = vunpack.c.l.b16 %v120
    %v587 = vunpack.c.h.b16 %v120
    %v588 = vunpack.c.l.b16 %v121
    %v589 = vunpack.c.h.b16 %v121
    %v590 = vunpack.c.l.b16 %v122
    %v591 = vunpack.c.h.b16 %v122
    %v592 = vunpack.c.l.b16 %v123
    %v593 = vunpack.c.h.b16 %v123
    %v594 = vunpack.c.l.b16 %v124
    %v595 = vunpack.c.h.b16 %v124
    %v596 = vunpack.c.l.b16 %v125
    %v597 = vunpack.c.h.b16 %v125
    %v598 = vunpack.c.l.b16 %v126
    %v599 = vunpack.c.h.b16 %v126
    %v600 = vunpack.c.l.b16 %v127
    %v601 = vunpack.c.h.b16 %v127
    %v602 = vunpack.c.l.b16 %v128
    %v603 = vunpack.c.h.b16 %v128
    %v604 = vunpack.c.l.b16 %v129
    %v605 = vunpack.c.h.b16 %v129
    %v606 = vunpack.c.l.b16 %v130
    %v607 = vunpack.c.h.b16 %v130
    %v608 = vunpack.c.l.b16 %v131
    %v609 = vunpack.c.h.b16 %v131
    %v610 = vunpack.c.l.b16 %v132
    %v611 = vunpack.c.h.b16 %v132
    %v612 = vunpack.c.l.b16 %v133
    %v613 = vunpack.c.h.b16 %v133
    %v614 = vunpack.c.l.b16 %v134
    %v615 = vunpack.c.h.b16 %v134
    %v616 = vunpack.c.l.b16 %v135
    %v617 = vunpack.c.h.b16 %v135
    %v618 = vunpack.c.l.b16 %v136
    %v619 = vunpack.c.h.b16 %v136
    %v620 = vunpack.c.l.b16 %v137
    %v621 = vunpack.c.h.b16 %v137
    %v622 = vunpack.c.l.b16 %v138
    %v623 = vunpack.c.h.b16 %v138
    %v624 = vunpack.c.l.b16 %v139
    %v625 = vunpack.c.h.b16 %v139
    %v626 = vunpack.c.l.b16 %v140
    %v627 = vunpack.c.h.b16 %v140
    %v628 = vunpack.c.l.b16 %v141
    %v629 = vunpack.c.h.b16 %v141
    %v630 = vunpack.c.l.b16 %v142
    %v631 = vunpack.c.h.b16 %v142
    %v632 = vunpack.c.l.b16 %v143
    %v633 = vunpack.c.h.b16 %v143
    %v634 = vunpack.c.l.b16 %v144
    %v635 = vunpack.c.h.b16 %v144
    %v636 = vunpack.c.l.b16 %v145
    %v637 = vunpack.c.h.b16 %v145
    %v638 = vunpack.c.l.b16 %v146
    %v639 = vunpack.c.h.b16 %v146
    %v640 = vunpack.c.l.b16 %v147
    %v641 = vunpack.c.h.b16 %v147
    %v642 = vunpack.c.l.b16 %v148
    %v643 = vunpack.c.h.b16 %v148
    %v644 = vunpack.c.l.b16 %v149
    %v645 = vunpack.c.h.b16 %v149
    %v646 = vunpack.c.l.b16 %v150
    %v647 = vunpack.c.h.b16 %v150
    %v648 = vunpack.c.l.b16 %v151
    %v649 = vunpack.c.h.b16 %v151
    %v650 = vunpack.c.l.b16 %v152
    %v651 = vunpack.c.h.b16 %v152
    %v652 = vunpack.c.l.b16 %v153
    %v653 = vunpack.c.h.b16 %v153
    %v654 = vunpack.c.l.b16 %v154
    %v655 = vunpack.c.h.b16 %v154
    %v656 = vunpack.c.l.b16 %v155
    %v657 = vunpack.c.h.b16 %v155
    %v658 = vunpack.c.l.b16 %v156
    %v659 = vunpack.c.h.b16 %v156
    %v660 = vunpack.c.l.b16 %v157
    %v661 = vunpack.c.h.b16 %v157
    %v662 = vunpack.c.l.b16 %v158
    %v663 = vunpack.c.h.b16 %v158
    %v664 = vunpack.c.l.b16 %v159
    %v665 = vunpack.c.h.b16 %v159
    %v666 = vunpack.c.l.b16 %v160
    %v667 = vunpack.c.h.b16 %v160
    %v668 = vunpack.c.l.b16 %v161
    %v669 = vunpack.c.h.b16 %v161
    %v670 = vunpack.c.l.b16 %v162
    %v671 = vunpack.c.h.b16 %v162
    %v672 = vunpack.c.l.b16 %v163
    %v673 = vunpack.c.h.b16 %v163
    %v674 = vunpack.c.l.b16 %v164
    %v675 = vunpack.c.h.b16 %v164
    %v676 = vunpack.c.l.b16 %v165
    %v677 = vunpack.c.h.b16 %v165
    %v678 = vunpack.c.l.b16 %v166
    %v679 = vunpack.c.h.b16 %v166
    %v680 = vunpack.c.l.b16 %v167
    %v681 = vunpack.c.h.b16 %v167
    %v682 = vunpack.c.l.b16 %v168
    %v683 = vunpack.c.h.b16 %v168
    %v684 = vunpack.c.l.b16 %v169
    %v685 = vunpack.c.h.b16 %v169
    %v686 = vunpack.c.l.b16 %v170
    %v687 = vunpack.c.h.b16 %v170
    %v688 = vunpack.c.l.b16 %v171
    %v689 = vunpack.c.h.b16 %v171
    %v690 = vunpack.c.l.b16 %v172
    %v691 = vunpack.c.h.b16 %v172
    %v692 = vunpack.c.l.b16 %v173
    %v693 = vunpack.c.h.b16 %v173
    %v694 = vunpack.c.l.b16 %v174
    %v695 = vunpack.c.h.b16 %v174
    %v696 = vunpack.c.l.b16 %v175
    %v697 = vunpack.c.h.b16 %v175
    %v698 = vunpack.c.l.b16 %v176
    %v699 = vunpack.c.h.b16 %v176
    %v700 = vunpack.c.l.b16 %v177
    %v701 = vunpack.c.h.b16 %v177
    %v702 = vunpack.c.l.b16 %v178
    %v703 = vunpack.c.h.b16 %v178
    %v704 = vunpack.c.l.b16 %v179
    %v705 = vunpack.c.h.b16 %v179
    %v706 = vunpack.c.l.b16 %v180
    %v707 = vunpack.c.h.b16 %v180
    %v708 = vunpack.c.l.b16 %v181
    %v709 = vunpack.c.h.b16 %v181
    %v710 = vunpack.c.l.b16 %v182
    %v711 = vunpack.c.h.b16 %v182
    %v712 = vunpack.c.l.b16 %v183
    %v713 = vunpack.c.h.b16 %v183
    %v714 = vunpack.c.l.b16 %v184
    %v715 = vunpack.c.h.b16 %v184
    %v716 = vunpack.c.l.b16 %v185
    %v717 = vunpack.c.h.b16 %v185
    %v718 = vunpack.c.l.b16 %v186
    %v719 = vunpack.c.h.b16 %v186
    %v720 = vunpack.c.l.b16 %v187
    %v721 = vunpack.c.h.b16 %v187
    %v722 = vunpack.c.l.b16 %v188
    %v723 = vunpack.c.h.b16 %v188
    %v724 = vunpack.c.l.b16 %v189
    %v725 = vunpack.c.h.b16 %v189
    %v726 = vunpack.c.l.b16 %v190
    %v727 = vunpack.c.h.b16 %v190
    %v728 = vunpack.c.l.b16 %v191
    %v729 = vunpack.c.h.b16 %v191
    %v730 = vunpack.c.l.b16 %v192
    %v731 = vunpack.c.h.b16 %v192
    %v732 = vunpack.c.l.b16 %v193
    %v733 = vunpack.c.h.b16 %v193
    %v734 = vunpack.c.l.b16 %v194
    %v735 = vunpack.c.h.b16 %v194
    %v736 = vunpack.c.l.b16 %v195
    %v737 = vunpack.c.h.b16 %v195
    %v738 = vunpack.c.l.b16 %v196
    %v739 = vunpack.c.h.b16 %v196
    %v740 = vunpack.c.l.b16 %v197
    %v741 = vunpack.c.h.b16 %v197
    %v742 = vunpack.c.l.b16 %v198
    %v743 = vunpack.c.h.b16 %v198
    %v744 = vunpack.c.l.b16 %v199
    %v745 = vunpack.c.h.b16 %v199
    %v746 = vunpack.c.l.b16 %v200
    %v747 = vunpack.c.h.b16 %v200
    %v748 = vunpack.c.l.b16 %v201
    %v749 = vunpack.c.h.b16 %v201
    %v750 = vunpack.c.l.b16 %v202
    %v751 = vunpack.c.h.b16 %v202
    %v752 = vunpack.c.l.b16 %v203
    %v753 = vunpack.c.h.b16 %v203
    %v754 = vunpack.c.l.b16 %v204
    %v755 = vunpack.c.h.b16 %v204
    %v756 = vunpack.c.l.b16 %v205
    %v757 = vunpack.c.h.b16 %v205
    %v758 = vunpack.c.l.b16 %v206
    %v759 = vunpack.c.h.b16 %v206
    %v760 = vunpack.c.l.b16 %v207
    %v761 = vunpack.c.h.b16 %v207
    %v762 = vunpack.c.l.b16 %v208
    %v763 = vunpack.c.h.b16 %v208
    %v764 = vunpack.c.l.b16 %v209
    %v765 = vunpack.c.h.b16 %v209
    %v766 = vunpack.c.l.b16 %v210
    %v767 = vunpack.c.h.b16 %v210
    %v768 = vunpack.c.l.b16 %v211
    %v769 = vunpack.c.h.b16 %v211
    %v770 = vunpack.c.l.b16 %v212
    %v771 = vunpack.c.h.b16 %v212
    %v772 = vunpack.c.l.b16 %v213
    %v773 = vunpack.c.h.b16 %v213
    %v774 = vunpack.c.l.b16 %v214
    %v775 = vunpack.c.h.b16 %v214
    %v776 = vunpack.c.l.b16 %v215
    %v777 = vunpack.c.h.b16 %v215
    %v778 = vunpack.c.l.b16 %v216
    %v779 = vunpack.c.h.b16 %v216
    %v780 = vunpack.c.l.b16 %v217
    %v781 = vunpack.c.h.b16 %v217
    %v782 = vunpack.c.l.b16 %v218
    %v783 = vunpack.c.h.b16 %v218
    %v784 = vunpack.c.l.b16 %v219
    %v785 = vunpack.c.h.b16 %v219
    %v786 = vunpack.c.l.b16 %v220
    %v787 = vunpack.c.h.b16 %v220
    %v788 = vunpack.c.l.b16 %v221
    %v789 = vunpack.c.h.b16 %v221
    %v790 = vunpack.c.l.b16 %v222
    %v791 = vunpack.c.h.b16 %v222
    %v792 = vunpack.c.l.b16 %v223
    %v793 = vunpack.c.h.b16 %v223
    %v794 = vunpack.c.l.b16 %v224
    %v795 = vunpack.c.h.b16 %v224
    %v796 = vunpack.c.l.b16 %v225
    %v797 = vunpack.c.h.b16 %v225
    %v798 = vunpack.c.l.b16 %v226
    %v799 = vunpack.c.h.b16 %v226
    %v800 = vunpack.c.l.b16 %v227
    %v801 = vunpack.c.h.b16 %v227
    %v802 = vunpack.c.l.b16 %v228
    %v803 = vunpack.c.h.b16 %v228
    %v804 = vunpack.c.l.b16 %v229
    %v805 = vunpack.c.h.b16 %v229
    %v806 = vunpack.c.l.b16 %v230
    %v807 = vunpack.c.h.b16 %v230
    %v808 = vunpack.c.l.b16 %v231
    %v809 = vunpack.c.h.b16 %v231
    %v810 = vunpack.c.l.b16 %v232
    %v811 = vunpack.c.h.b16 %v232
    %v812 = vunpack.c.l.b16 %v233
    %v813 = vunpack.c.h.b16 %v233
    %v814 = vunpack.c.l.b16 %v234
    %v815 = vunpack.c.h.b16 %v234
    %v816 = vunpack.c.l.b16 %v235
    %v817 = vunpack.c.h.b16 %v235
    %v818 = vunpack.c.l.b16 %v236
    %v819 = vunpack.c.h.b16 %v236
    %v820 = vunpack.c.l.b16 %v237
    %v821 = vunpack.c.h.b16 %v237
    %v822 = vpack.c.b16 %v492, %v470
    %v823 = vpack.c.b16 %v493, %v471
    %v824 = vpack.c.b16 %v494, %v472
    %v825 = vpack.c.b16 %v495, %v473
    %v826 = vpack.c.b16 %v496, %v474
    %v827 = vpack.c.b16 %v497, %v475
    %v828 = vpack.c.b16 %v498, %v476
    %v829 = vpack.c.b16 %v499, %v477
    %v830 = vpack.c.b16 %v500, %v478
    %v831 = vpack.c.b16 %v501, %v479
    %v832 = vpack.c.b16 %v502, %v480
    %v833 = vpack.c.b16 %v503, %v481
    %v834 = vpack.c.b16 %v504, %v482
    %v835 = vpack.c.b16 %v505, %v483
    %v836 = vpack.c.b16 %v506, %v484
    %v837 = vpack.c.b16 %v507, %v485
    %v838 = vpack.c.b16 %v508, %v486
    %v839 = vpack.c.b16 %v509, %v487
    %v840 = vpack.c.b16 %v510, %v488
    %v841 = vpack.c.b16 %v511, %v489
    %v842 = vpack.c.b16 %v512, %v490
    %v843 = vpack.c.b16 %v513, %v491
    %v844 = vpack.c.b16 %v536, %v514
    %v845 = vpack.c.b16 %v537, %v515
    %v846 = vpack.c.b16 %v538, %v516
    %v847 = vpack.c.b16 %v539, %v517
    %v848 = vpack.c.b16 %v540, %v518
    %v849 = vpack.c.b16 %v541, %v519
    %v850 = vpack.c.b16 %v542, %v520
    %v851 = vpack.c.b16 %v543, %v521
    %v852 = vpack.c.b16 %v544, %v522
    %v853 = vpack.c.b16 %v545, %v523
    %v854 = vpack.c.b16 %v546, %v524
    %v855 = vpack.c.b16 %v547, %v525
    %v856 = vpack.c.b16 %v548, %v526
    %v857 = vpack.c.b16 %v549, %v527
    %v858 = vpack.c.b16 %v550, %v528
    %v859 = vpack.c.b16 %v551, %v529
    %v860 = vpack.c.b16 %v552, %v530
    %v861 = vpack.c.b16 %v553, %v531
    %v862 = vpack.c.b16 %v554, %v532
    %v863 = vpack.c.b16 %v555, %v533
    %v864 = vpack.c.b16 %v556, %v534
    %v865 = vpack.c.b16 %v557, %v535
    %v866 = vpack.c.b16 %v580, %v558
    %v867 = vpack.c.b16 %v581, %v559
    %v868 = vpack.c.b16 %v582, %v560
    %v869 = vpack.c.b16 %v583, %v561
    %v870 = vpack.c.b16 %v584, %v562
    %v871 = vpack.c.b16 %v585, %v563
    %v872 = vpack.c.b16 %v586, %v564
    %v873 = vpack.c.b16 %v587, %v565
    %v874 = vpack.c.b16 %v588, %v566
    %v875 = vpack.c.b16 %v589, %v567
    %v876 = vpack.c.b16 %v590, %v568
    %v877 = vpack.c.b16 %v591, %v569
    %v878 = vpack.c.b16 %v592, %v570
    %v879 = vpack.c.b16 %v593, %v571
    %v880 = vpack.c.b16 %v594, %v572
    %v881 = vpack.c.b16 %v595, %v573
    %v882 = vpack.c.b16 %v596, %v574
    %v883 = vpack.c.b16 %v597, %v575
    %v884 = vpack.c.b16 %v598, %v576
    %v885 = vpack.c.b16 %v599, %v577
    %v886 = vpack.c.b16 %v600, %v578
    %v887 = vpack.c.b16 %v601, %v579
    %v888 = vpack.c.b16 %v624, %v602
    %v889 = vpack.c.b16 %v625, %v603
    %v890 = vpack.c.b16 %v626, %v604
    %v891 = vpack.c.b16 %v627, %v605
    %v892 = vpack.c.b16 %v628, %v606
    %v893 = vpack.c.b16 %v629, %v607
    %v894 = vpack.c.b16 %v630, %v608
    %v895 = vpack.c.b16 %v631, %v609
    %v896 = vpack.c.b16 %v632, %v610
    %v897 = vpack.c.b16 %v633, %v611
    %v898 = vpack.c.b16 %v634, %v612
    %v899 = vpack.c.b16 %v635, %v613
    %v900 = vpack.c.b16 %v636, %v614
    %v901 = vpack.c.b16 %v637, %v615
    %v902 = vpack.c.b16 %v638, %v616
    %v903 = vpack.c.b16 %v639, %v617
    %v904 = vpack.c.b16 %v640, %v618
    %v905 = vpack.c.b16 %v641, %v619
    %v906 = vpack.c.b16 %v642, %v620
    %v907 = vpack.c.b16 %v643, %v621
    %v908 = vpack.c.b16 %v644, %v622
    %v909 = vpack.c.b16 %v645, %v623
    %v910 = vpack.c.b16 %v668, %v646
    %v911 = vpack.c.b16 %v669, %v647
    %v912 = vpack.c.b16 %v670, %v648
    %v913 = vpack.c.b16 %v671, %v649
    %v914 = vpack.c.b16 %v672, %v650
    %v915 = vpack.c.b16 %v673, %v651
    %v916 = vpack.c.b16 %v674, %v652
    %v917 = vpack.c.b16 %v675, %v653
    %v918 = vpack.c.b16 %v676, %v654
    %v919 = vpack.c.b16 %v677, %v655
    %v920 = vpack.c.b16 %v678, %v656
    %v921 = vpack.c.b16 %v679, %v657
    %v922 = vpack.c.b16 %v680, %v658
    %v923 = vpack.c.b16 %v681, %v659
    %v924 = vpack.c.b16 %v682, %v660
    %v925 = vpack.c.b16 %v683, %v661
    %v926 = vpack.c.b16 %v684, %v662
    %v927 = vpack.c.b16 %v685, %v663
    %v928 = vpack.c.b16 %v686, %v664
    %v929 = vpack.c.b16 %v687, %v665
    %v930 = vpack.c.b16 %v688, %v666
    %v931 = vpack.c.b16 %v689, %v667
    %v932 = vpack.c.b16 %v712, %v690
    %v933 = vpack.c.b16 %v713, %v691
    %v934 = vpack.c.b16 %v714, %v692
    %v935 = vpack.c.b16 %v715, %v693
    %v936 = vpack.c.b16 %v716, %v694
    %v937 = vpack.c.b16 %v717, %v695
    %v938 = vpack.c.b16 %v718, %v696
    %v939 = vpack.c.b16 %v719, %v697
    %v940 = vpack.c.b16 %v720, %v698
    %v941 = vpack.c.b16 %v721, %v699
    %v942 = vpack.c.b16 %v722, %v700
    %v943 = vpack.c.b16 %v723, %v701
    %v944 = vpack.c.b16 %v724, %v702
    %v945 = vpack.c.b16 %v725, %v703
    %v946 = vpack.c.b16 %v726, %v704
    %v947 = vpack.c.b16 %v727, %v705
    %v948 = vpack.c.b16 %v728, %v706
    %v949 = vpack.c.b16 %v729, %v707
    %v950 = vpack.c.b16 %v730, %v708
    %v951 = vpack.c.b16 %v731, %v709
    %v952 = vpack.c.b16 %v732, %v710
    %v953 = vpack.c.b16 %v733, %v711
    %v954 = vpack.c.b16 %v756, %v734
    %v955 = vpack.c.b16 %v757, %v735
    %v956 = vpack.c.b16 %v758, %v736
    %v957 = vpack.c.b16 %v759, %v737
    %v958 = vpack.c.b16 %v760, %v738
    %v959 = vpack.c.b16 %v761, %v739
    %v960 = vpack.c.b16 %v762, %v740
    %v961 = vpack.c.b16 %v763, %v741
    %v962 = vpack.c.b16 %v764, %v742
    %v963 = vpack.c.b16 %v765, %v743
    %v964 = vpack.c.b16 %v766, %v744
    %v965 = vpack.c.b16 %v767, %v745
    %v966 = vpack.c.b16 %v768, %v746
    %v967 = vpack.c.b16 %v769, %v747
    %v968 = vpack.c.b16 %v770, %v748
    %v969 = vpack.c.b16 %v771, %v749
    %v970 = vpack.c.b16 %v772, %v750
    %v971 = vpack.c.b16 %v773, %v751
    %v972 = vpack.c.b16 %v774, %v752
    %v973 = vpack.c.b16 %v775, %v753
    %v974 = vpack.c.b16 %v776, %v754
    %v975 = vpack.c.b16 %v777, %v755
    %v976 = vpack.c.b16 %v800, %v778
    %v977 = vpack.c.b16 %v801, %v779
    %v978 = vpack.c.b16 %v802, %v780
    %v979 = vpack.c.b16 %v803, %v781
    %v980 = vpack.c.b16 %v804, %v782
    %v981 = vpack.c.b16 %v805, %v783
    %v982 = vpack.c.b16 %v806, %v784
    %v983 = vpack.c.b16 %v807, %v785
    %v984 = vpack.c.b16 %v808, %v786
    %v985 = vpack.c.b16 %v809, %v787
    %v986 = vpack.c.b16 %v810, %v788
    %v987 = vpack.c.b16 %v811, %v789
    %v988 = vpack.c.b16 %v812, %v790
    %v989 = vpack.c.b16 %v813, %v791
    %v990 = vpack.c.b16 %v814, %v792
    %v991 = vpack.c.b16 %v815, %v793
    %v992 = vpack.c.b16 %v816, %v794
    %v993 = vpack.c.b16 %v817, %v795
    %v994 = vpack.c.b16 %v818, %v796
    %v995 = vpack.c.b16 %v819, %v797
    %v996 = vpack.c.b16 %v820, %v798
    %v997 = vpack.c.b16 %v821, %v799
    %1174 = vmatpush.bf16.msra.mxu0 %v976
    %1175 = vmatpush.bf16.msra.mxu0 %v954
    %1176 = vmatpush.bf16.msra.mxu0 %v932
    %1177 = vmatpush.bf16.msra.mxu0 %v910
    %1178 = vmatpush.bf16.msra.mxu0 %v888
    %1179 = vmatpush.bf16.msra.mxu0 %v866
    %1180 = vmatpush.bf16.msra.mxu0 %v844
    %1181 = vmatpush.bf16.msra.mxu0 %v822
    %1182 = vmatmul.bf16.gmra.mxu0 %v292
    %v1183 = vpop.f32.mrf.mxu0
    %v1184 = vadd.f32 %v244, %v1183
    %v1185 = vpop.f32.mrf.mxu0
    %v1186 = vadd.f32 %v244, %v1185
    %1187 = vdwg.mxu0
    %1188 = vmatpush.bf16.msra.mxu0 %v977
    %1189 = vmatpush.bf16.msra.mxu0 %v955
    %1190 = vmatpush.bf16.msra.mxu0 %v933
    %1191 = vmatpush.bf16.msra.mxu0 %v911
    %1192 = vmatpush.bf16.msra.mxu0 %v889
    %1193 = vmatpush.bf16.msra.mxu0 %v867
    %1194 = vmatpush.bf16.msra.mxu0 %v845
    %1195 = vmatpush.bf16.msra.mxu0 %v823
    %1196 = vmatmul.bf16.gmra.mxu0 %v292
    %v1197 = vpop.f32.mrf.mxu0
    %v1198 = vadd.f32 %v245, %v1197
    %v1199 = vpop.f32.mrf.mxu0
    %v1200 = vadd.f32 %v245, %v1199
    %1201 = vdwg.mxu0
    %1202 = vmatpush.bf16.msra.mxu0 %v978
    %1203 = vmatpush.bf16.msra.mxu0 %v956
    %1204 = vmatpush.bf16.msra.mxu0 %v934
    %1205 = vmatpush.bf16.msra.mxu0 %v912
    %1206 = vmatpush.bf16.msra.mxu0 %v890
    %1207 = vmatpush.bf16.msra.mxu0 %v868
    %1208 = vmatpush.bf16.msra.mxu0 %v846
    %1209 = vmatpush.bf16.msra.mxu0 %v824
    %1210 = vmatmul.bf16.gmra.mxu0 %v292
    %v1211 = vpop.f32.mrf.mxu0
    %v1212 = vadd.f32 %v246, %v1211
    %v1213 = vpop.f32.mrf.mxu0
    %v1214 = vadd.f32 %v246, %v1213
    %1215 = vdwg.mxu0
    %1216 = vmatpush.bf16.msra.mxu0 %v979
    %1217 = vmatpush.bf16.msra.mxu0 %v957
    %1218 = vmatpush.bf16.msra.mxu0 %v935
    %1219 = vmatpush.bf16.msra.mxu0 %v913
    %1220 = vmatpush.bf16.msra.mxu0 %v891
    %1221 = vmatpush.bf16.msra.mxu0 %v869
    %1222 = vmatpush.bf16.msra.mxu0 %v847
    %1223 = vmatpush.bf16.msra.mxu0 %v825
    %1224 = vmatmul.bf16.gmra.mxu0 %v292
    %v1225 = vpop.f32.mrf.mxu0
    %v1226 = vadd.f32 %v247, %v1225
    %v1227 = vpop.f32.mrf.mxu0
    %v1228 = vadd.f32 %v247, %v1227
    %1229 = vdwg.mxu0
    %1230 = vmatpush.bf16.msra.mxu0 %v980
    %1231 = vmatpush.bf16.msra.mxu0 %v958
    %1232 = vmatpush.bf16.msra.mxu0 %v936
    %1233 = vmatpush.bf16.msra.mxu0 %v914
    %1234 = vmatpush.bf16.msra.mxu0 %v892
    %1235 = vmatpush.bf16.msra.mxu0 %v870
    %1236 = vmatpush.bf16.msra.mxu0 %v848
    %1237 = vmatpush.bf16.msra.mxu0 %v826
    %1238 = vmatmul.bf16.gmra.mxu0 %v292
    %v1239 = vpop.f32.mrf.mxu0
    %v1240 = vadd.f32 %v248, %v1239
    %v1241 = vpop.f32.mrf.mxu0
    %v1242 = vadd.f32 %v248, %v1241
    %1243 = vdwg.mxu0
    %1244 = vmatpush.bf16.msra.mxu0 %v981
    %1245 = vmatpush.bf16.msra.mxu0 %v959
    %1246 = vmatpush.bf16.msra.mxu0 %v937
    %1247 = vmatpush.bf16.msra.mxu0 %v915
    %1248 = vmatpush.bf16.msra.mxu0 %v893
    %1249 = vmatpush.bf16.msra.mxu0 %v871
    %1250 = vmatpush.bf16.msra.mxu0 %v849
    %1251 = vmatpush.bf16.msra.mxu0 %v827
    %1252 = vmatmul.bf16.gmra.mxu0 %v292
    %v1253 = vpop.f32.mrf.mxu0
    %v1254 = vadd.f32 %v249, %v1253
    %v1255 = vpop.f32.mrf.mxu0
    %v1256 = vadd.f32 %v249, %v1255
    %1257 = vdwg.mxu0
    %1258 = vmatpush.bf16.msra.mxu0 %v982
    %1259 = vmatpush.bf16.msra.mxu0 %v960
    %1260 = vmatpush.bf16.msra.mxu0 %v938
    %1261 = vmatpush.bf16.msra.mxu0 %v916
    %1262 = vmatpush.bf16.msra.mxu0 %v894
    %1263 = vmatpush.bf16.msra.mxu0 %v872
    %1264 = vmatpush.bf16.msra.mxu0 %v850
    %1265 = vmatpush.bf16.msra.mxu0 %v828
    %1266 = vmatmul.bf16.gmra.mxu0 %v292
    %v1267 = vpop.f32.mrf.mxu0
    %v1268 = vadd.f32 %v250, %v1267
    %v1269 = vpop.f32.mrf.mxu0
    %v1270 = vadd.f32 %v250, %v1269
    %1271 = vdwg.mxu0
    %1272 = vmatpush.bf16.msra.mxu0 %v983
    %1273 = vmatpush.bf16.msra.mxu0 %v961
    %1274 = vmatpush.bf16.msra.mxu0 %v939
    %1275 = vmatpush.bf16.msra.mxu0 %v917
    %1276 = vmatpush.bf16.msra.mxu0 %v895
    %1277 = vmatpush.bf16.msra.mxu0 %v873
    %1278 = vmatpush.bf16.msra.mxu0 %v851
    %1279 = vmatpush.bf16.msra.mxu0 %v829
    %1280 = vmatmul.bf16.gmra.mxu0 %v292
    %v1281 = vpop.f32.mrf.mxu0
    %v1282 = vadd.f32 %v251, %v1281
    %v1283 = vpop.f32.mrf.mxu0
    %v1284 = vadd.f32 %v251, %v1283
    %1285 = vdwg.mxu0
    %1286 = vmatpush.bf16.msra.mxu0 %v984
    %1287 = vmatpush.bf16.msra.mxu0 %v962
    %1288 = vmatpush.bf16.msra.mxu0 %v940
    %1289 = vmatpush.bf16.msra.mxu0 %v918
    %1290 = vmatpush.bf16.msra.mxu0 %v896
    %1291 = vmatpush.bf16.msra.mxu0 %v874
    %1292 = vmatpush.bf16.msra.mxu0 %v852
    %1293 = vmatpush.bf16.msra.mxu0 %v830
    %1294 = vmatmul.bf16.gmra.mxu0 %v292
    %v1295 = vpop.f32.mrf.mxu0
    %v1296 = vadd.f32 %v252, %v1295
    %v1297 = vpop.f32.mrf.mxu0
    %v1298 = vadd.f32 %v252, %v1297
    %1299 = vdwg.mxu0
    %1300 = vmatpush.bf16.msra.mxu0 %v985
    %1301 = vmatpush.bf16.msra.mxu0 %v963
    %1302 = vmatpush.bf16.msra.mxu0 %v941
    %1303 = vmatpush.bf16.msra.mxu0 %v919
    %1304 = vmatpush.bf16.msra.mxu0 %v897
    %1305 = vmatpush.bf16.msra.mxu0 %v875
    %1306 = vmatpush.bf16.msra.mxu0 %v853
    %1307 = vmatpush.bf16.msra.mxu0 %v831
    %1308 = vmatmul.bf16.gmra.mxu0 %v292
    %v1309 = vpop.f32.mrf.mxu0
    %v1310 = vadd.f32 %v253, %v1309
    %v1311 = vpop.f32.mrf.mxu0
    %v1312 = vadd.f32 %v253, %v1311
    %1313 = vdwg.mxu0
    %1314 = vmatpush.bf16.msra.mxu0 %v986
    %1315 = vmatpush.bf16.msra.mxu0 %v964
    %1316 = vmatpush.bf16.msra.mxu0 %v942
    %1317 = vmatpush.bf16.msra.mxu0 %v920
    %1318 = vmatpush.bf16.msra.mxu0 %v898
    %1319 = vmatpush.bf16.msra.mxu0 %v876
    %1320 = vmatpush.bf16.msra.mxu0 %v854
    %1321 = vmatpush.bf16.msra.mxu0 %v832
    %1322 = vmatmul.bf16.gmra.mxu0 %v292
    %v1323 = vpop.f32.mrf.mxu0
    %v1324 = vadd.f32 %v254, %v1323
    %v1325 = vpop.f32.mrf.mxu0
    %v1326 = vadd.f32 %v254, %v1325
    %1327 = vdwg.mxu0
    %1328 = vmatpush.bf16.msra.mxu0 %v987
    %1329 = vmatpush.bf16.msra.mxu0 %v965
    %1330 = vmatpush.bf16.msra.mxu0 %v943
    %1331 = vmatpush.bf16.msra.mxu0 %v921
    %1332 = vmatpush.bf16.msra.mxu0 %v899
    %1333 = vmatpush.bf16.msra.mxu0 %v877
    %1334 = vmatpush.bf16.msra.mxu0 %v855
    %1335 = vmatpush.bf16.msra.mxu0 %v833
    %1336 = vmatmul.bf16.gmra.mxu0 %v292
    %v1337 = vpop.f32.mrf.mxu0
    %v1338 = vadd.f32 %v255, %v1337
    %v1339 = vpop.f32.mrf.mxu0
    %v1340 = vadd.f32 %v255, %v1339
    %1341 = vdwg.mxu0
    %1342 = vmatpush.bf16.msra.mxu0 %v988
    %1343 = vmatpush.bf16.msra.mxu0 %v966
    %1344 = vmatpush.bf16.msra.mxu0 %v944
    %1345 = vmatpush.bf16.msra.mxu0 %v922
    %1346 = vmatpush.bf16.msra.mxu0 %v900
    %1347 = vmatpush.bf16.msra.mxu0 %v878
    %1348 = vmatpush.bf16.msra.mxu0 %v856
    %1349 = vmatpush.bf16.msra.mxu0 %v834
    %1350 = vmatmul.bf16.gmra.mxu0 %v292
    %v1351 = vpop.f32.mrf.mxu0
    %v1352 = vadd.f32 %v256, %v1351
    %v1353 = vpop.f32.mrf.mxu0
    %v1354 = vadd.f32 %v256, %v1353
    %1355 = vdwg.mxu0
    %1356 = vmatpush.bf16.msra.mxu0 %v989
    %1357 = vmatpush.bf16.msra.mxu0 %v967
    %1358 = vmatpush.bf16.msra.mxu0 %v945
    %1359 = vmatpush.bf16.msra.mxu0 %v923
    %1360 = vmatpush.bf16.msra.mxu0 %v901
    %1361 = vmatpush.bf16.msra.mxu0 %v879
    %1362 = vmatpush.bf16.msra.mxu0 %v857
    %1363 = vmatpush.bf16.msra.mxu0 %v835
    %1364 = vmatmul.bf16.gmra.mxu0 %v292
    %v1365 = vpop.f32.mrf.mxu0
    %v1366 = vadd.f32 %v257, %v1365
    %v1367 = vpop.f32.mrf.mxu0
    %v1368 = vadd.f32 %v257, %v1367
    %1369 = vdwg.mxu0
    %1370 = vmatpush.bf16.msra.mxu0 %v990
    %1371 = vmatpush.bf16.msra.mxu0 %v968
    %1372 = vmatpush.bf16.msra.mxu0 %v946
    %1373 = vmatpush.bf16.msra.mxu0 %v924
    %1374 = vmatpush.bf16.msra.mxu0 %v902
    %1375 = vmatpush.bf16.msra.mxu0 %v880
    %1376 = vmatpush.bf16.msra.mxu0 %v858
    %1377 = vmatpush.bf16.msra.mxu0 %v836
    %1378 = vmatmul.bf16.gmra.mxu0 %v292
    %v1379 = vpop.f32.mrf.mxu0
    %v1380 = vadd.f32 %v258, %v1379
    %v1381 = vpop.f32.mrf.mxu0
    %v1382 = vadd.f32 %v258, %v1381
    %1383 = vdwg.mxu0
    %1384 = vmatpush.bf16.msra.mxu0 %v991
    %1385 = vmatpush.bf16.msra.mxu0 %v969
    %1386 = vmatpush.bf16.msra.mxu0 %v947
    %1387 = vmatpush.bf16.msra.mxu0 %v925
    %1388 = vmatpush.bf16.msra.mxu0 %v903
    %1389 = vmatpush.bf16.msra.mxu0 %v881
    %1390 = vmatpush.bf16.msra.mxu0 %v859
    %1391 = vmatpush.bf16.msra.mxu0 %v837
    %1392 = vmatmul.bf16.gmra.mxu0 %v292
    %v1393 = vpop.f32.mrf.mxu0
    %v1394 = vadd.f32 %v259, %v1393
    %v1395 = vpop.f32.mrf.mxu0
    %v1396 = vadd.f32 %v259, %v1395
    %1397 = vdwg.mxu0
    %1398 = vmatpush.bf16.msra.mxu0 %v992
    %1399 = vmatpush.bf16.msra.mxu0 %v970
    %1400 = vmatpush.bf16.msra.mxu0 %v948
    %1401 = vmatpush.bf16.msra.mxu0 %v926
    %1402 = vmatpush.bf16.msra.mxu0 %v904
    %1403 = vmatpush.bf16.msra.mxu0 %v882
    %1404 = vmatpush.bf16.msra.mxu0 %v860
    %1405 = vmatpush.bf16.msra.mxu0 %v838
    %1406 = vmatmul.bf16.gmra.mxu0 %v292
    %v1407 = vpop.f32.mrf.mxu0
    %v1408 = vadd.f32 %v260, %v1407
    %v1409 = vpop.f32.mrf.mxu0
    %v1410 = vadd.f32 %v260, %v1409
    %1411 = vdwg.mxu0
    %1412 = vmatpush.bf16.msra.mxu0 %v993
    %1413 = vmatpush.bf16.msra.mxu0 %v971
    %1414 = vmatpush.bf16.msra.mxu0 %v949
    %1415 = vmatpush.bf16.msra.mxu0 %v927
    %1416 = vmatpush.bf16.msra.mxu0 %v905
    %1417 = vmatpush.bf16.msra.mxu0 %v883
    %1418 = vmatpush.bf16.msra.mxu0 %v861
    %1419 = vmatpush.bf16.msra.mxu0 %v839
    %1420 = vmatmul.bf16.gmra.mxu0 %v292
    %v1421 = vpop.f32.mrf.mxu0
    %v1422 = vadd.f32 %v261, %v1421
    %v1423 = vpop.f32.mrf.mxu0
    %v1424 = vadd.f32 %v261, %v1423
    %1425 = vdwg.mxu0
    %1426 = vmatpush.bf16.msra.mxu0 %v994
    %1427 = vmatpush.bf16.msra.mxu0 %v972
    %1428 = vmatpush.bf16.msra.mxu0 %v950
    %1429 = vmatpush.bf16.msra.mxu0 %v928
    %1430 = vmatpush.bf16.msra.mxu0 %v906
    %1431 = vmatpush.bf16.msra.mxu0 %v884
    %1432 = vmatpush.bf16.msra.mxu0 %v862
    %1433 = vmatpush.bf16.msra.mxu0 %v840
    %1434 = vmatmul.bf16.gmra.mxu0 %v292
    %v1435 = vpop.f32.mrf.mxu0
    %v1436 = vadd.f32 %v262, %v1435
    %v1437 = vpop.f32.mrf.mxu0
    %v1438 = vadd.f32 %v262, %v1437
    %1439 = vdwg.mxu0
    %1440 = vmatpush.bf16.msra.mxu0 %v995
    %1441 = vmatpush.bf16.msra.mxu0 %v973
    %1442 = vmatpush.bf16.msra.mxu0 %v951
    %1443 = vmatpush.bf16.msra.mxu0 %v929
    %1444 = vmatpush.bf16.msra.mxu0 %v907
    %1445 = vmatpush.bf16.msra.mxu0 %v885
    %1446 = vmatpush.bf16.msra.mxu0 %v863
    %1447 = vmatpush.bf16.msra.mxu0 %v841
    %1448 = vmatmul.bf16.gmra.mxu0 %v292
    %v1449 = vpop.f32.mrf.mxu0
    %v1450 = vadd.f32 %v263, %v1449
    %v1451 = vpop.f32.mrf.mxu0
    %v1452 = vadd.f32 %v263, %v1451
    %1453 = vdwg.mxu0
    %1454 = vmatpush.bf16.msra.mxu0 %v996
    %1455 = vmatpush.bf16.msra.mxu0 %v974
    %1456 = vmatpush.bf16.msra.mxu0 %v952
    %1457 = vmatpush.bf16.msra.mxu0 %v930
    %1458 = vmatpush.bf16.msra.mxu0 %v908
    %1459 = vmatpush.bf16.msra.mxu0 %v886
    %1460 = vmatpush.bf16.msra.mxu0 %v864
    %1461 = vmatpush.bf16.msra.mxu0 %v842
    %1462 = vmatmul.bf16.gmra.mxu0 %v292
    %v1463 = vpop.f32.mrf.mxu0
    %v1464 = vadd.f32 %v264, %v1463
    %v1465 = vpop.f32.mrf.mxu0
    %v1466 = vadd.f32 %v264, %v1465
    %1467 = vdwg.mxu0
    %1468 = vmatpush.bf16.msra.mxu0 %v997
    %1469 = vmatpush.bf16.msra.mxu0 %v975
    %1470 = vmatpush.bf16.msra.mxu0 %v953
    %1471 = vmatpush.bf16.msra.mxu0 %v931
    %1472 = vmatpush.bf16.msra.mxu0 %v909
    %1473 = vmatpush.bf16.msra.mxu0 %v887
    %1474 = vmatpush.bf16.msra.mxu0 %v865
    %1475 = vmatpush.bf16.msra.mxu0 %v843
    %1476 = vmatmul.bf16.gmra.mxu0 %v292
    %v1477 = vpop.f32.mrf.mxu0
    %v1478 = vadd.f32 %v265, %v1477
    %v1479 = vpop.f32.mrf.mxu0
    %v1480 = vadd.f32 %v265, %v1479
    %1481 = vdwg.mxu0
    %v1482 = vmax.f32 %v1184, 0.0
    %v1483 = vmax.f32 %v1198, 0.0
    %v1484 = vmax.f32 %v1212, 0.0
    %v1485 = vmax.f32 %v1226, 0.0
    %v1486 = vmax.f32 %v1240, 0.0
    %v1487 = vmax.f32 %v1254, 0.0
    %v1488 = vmax.f32 %v1268, 0.0
    %v1489 = vmax.f32 %v1282, 0.0
    %v1490 = vmax.f32 %v1296, 0.0
    %v1491 = vmax.f32 %v1310, 0.0
    %v1492 = vmax.f32 %v1324, 0.0
    %v1493 = vmax.f32 %v1338, 0.0
    %v1494 = vmax.f32 %v1352, 0.0
    %v1495 = vmax.f32 %v1366, 0.0
    %v1496 = vmax.f32 %v1380, 0.0
    %v1497 = vmax.f32 %v1394, 0.0
    %v1498 = vmax.f32 %v1408, 0.0
    %v1499 = vmax.f32 %v1422, 0.0
    %v1500 = vmax.f32 %v1436, 0.0
    %v1501 = vmax.f32 %v1450, 0.0
    %v1502 = vmax.f32 %v1464, 0.0
    %v1503 = vmax.f32 %v1478, 0.0
    %v1504 = vmax.f32 %v1186, 0.0
    %v1505 = vmax.f32 %v1200, 0.0
    %v1506 = vmax.f32 %v1214, 0.0
    %v1507 = vmax.f32 %v1228, 0.0
    %v1508 = vmax.f32 %v1242, 0.0
    %v1509 = vmax.f32 %v1256, 0.0
    %v1510 = vmax.f32 %v1270, 0.0
    %v1511 = vmax.f32 %v1284, 0.0
    %v1512 = vmax.f32 %v1298, 0.0
    %v1513 = vmax.f32 %v1312, 0.0
    %v1514 = vmax.f32 %v1326, 0.0
    %v1515 = vmax.f32 %v1340, 0.0
    %v1516 = vmax.f32 %v1354, 0.0
    %v1517 = vmax.f32 %v1368, 0.0
    %v1518 = vmax.f32 %v1382, 0.0
    %v1519 = vmax.f32 %v1396, 0.0
    %v1520 = vmax.f32 %v1410, 0.0
    %v1521 = vmax.f32 %v1424, 0.0
    %v1522 = vmax.f32 %v1438, 0.0
    %v1523 = vmax.f32 %v1452, 0.0
    %v1524 = vmax.f32 %v1466, 0.0
    %v1525 = vmax.f32 %v1480, 0.0
    %v1526 = vmax.f32 %v1482, %v1483
    %v1527 = vmax.f32 %v1504, %v1505
    %v1528 = vmax.f32 %v1526, %v1484
    %v1529 = vmax.f32 %v1527, %v1506
    %v1530 = vmax.f32 %v1528, %v1485
    %v1531 = vmax.f32 %v1529, %v1507
    %v1532 = vmax.f32 %v1530, %v1486
    %v1533 = vmax.f32 %v1531, %v1508
    %v1534 = vmax.f32 %v1532, %v1487
    %v1535 = vmax.f32 %v1533, %v1509
    %v1536 = vmax.f32 %v1534, %v1488
    %v1537 = vmax.f32 %v1535, %v1510
    %1538 = vst [vmem:[#allocation8] sm:$0xff] %v1536
    %1539 = vst [vmem:[#allocation8 + $0x20] sm:$0xff] %v1537
    %v1540 = vmax.f32 %v1489, %v1490
    %v1541 = vmax.f32 %v1511, %v1512
    %v1542 = vmax.f32 %v1540, %v1491
    %v1543 = vmax.f32 %v1541, %v1513
    %v1544 = vmax.f32 %v1542, %v1492
    %v1545 = vmax.f32 %v1543, %v1514
    %v1546 = vmax.f32 %v1544, %v1493
    %v1547 = vmax.f32 %v1545, %v1515
    %v1548 = vmax.f32 %v1546, %v1494
    %v1549 = vmax.f32 %v1547, %v1516
    %1550 = vst [vmem:[#allocation8 + $0x8] sm:$0xff] %v1548
    %1551 = vst [vmem:[#allocation8 + $0x28] sm:$0xff] %v1549
    %v1552 = vmax.f32 %v1495, %v1496
    %v1553 = vmax.f32 %v1517, %v1518
    %v1554 = vmax.f32 %v1552, %v1497
    %v1555 = vmax.f32 %v1553, %v1519
    %v1556 = vmax.f32 %v1554, %v1498
    %v1557 = vmax.f32 %v1555, %v1520
    %v1558 = vmax.f32 %v1556, %v1499
    %v1559 = vmax.f32 %v1557, %v1521
    %1560 = vst [vmem:[#allocation8 + $0x10] sm:$0xff] %v1558
    %1561 = vst [vmem:[#allocation8 + $0x30] sm:$0xff] %v1559
    %v1562 = vmax.f32 %v1500, %v1501
    %v1563 = vmax.f32 %v1522, %v1523
    %v1564 = vmax.f32 %v1562, %v1502
    %v1565 = vmax.f32 %v1563, %v1524
    %v1566 = vmax.f32 %v1564, %v1503
    %v1567 = vmax.f32 %v1565, %v1525
    %1568 = vst [vmem:[#allocation8 + $0x18] sm:$0xff] %v1566
    %1569 = vst [vmem:[#allocation8 + $0x38] sm:$0xff] %v1567
    // Predicated region
    $region26: #{tpu_custom_call.1} parent=1 // pred_check
      _
    $region27: #{tpu_custom_call.1} parent=1 // pred_check_branch
      %1571 = sbr.rel (0) target = $region29
    $region28: #{tpu_custom_call.1} parent=1 // pred_region
      %1573 = vsyncadd [#allocation4], 0
      %s1574 = sshll.u32 [#allocation8], 4
      %s1575 = int_to_ptr.vmem [resolvable:$true] %s1574
      %s1576 = sshll.u32 %s3, 4
      %s1577 = int_to_ptr.hbm [resolvable:$true] %s1576
      %1582 = dma.vmem_to_hbm [thread:$0]  %s1575, 1024, %s1577, [#allocation4], 512, 512, 32
    $region29: #{tpu_custom_call.1} parent=1 // pred_fallthru
      _
    // Predicated region
    $region30: #{tpu_custom_call.1} parent=1 // pred_check
      _
    $region31: #{tpu_custom_call.1} parent=1 // pred_check_branch
      %1584 = sbr.rel (0) target = $region33
    $region32: #{tpu_custom_call.1} parent=1 // pred_region
      %1586 = dma.done [#allocation4], 1024
    $region33: #{tpu_custom_call.1} parent=1 // pred_fallthru
      _
    %1587 = vsyncpa [#allocation3], 1
    %1588 = vsyncpa [#allocation6], 1
    %1589 = vsyncpa [#allocation4], 1

</llo_original>
